<compile_context>
chip_gen: v7x
topology: tpu7x:2x2x1
jax: 0.10.0
libtpu: 0.0.40
codegen_flags: <defaults>
</compile_context>

<pallas_src>
import functools

import jax
import jax.numpy as jnp
from jax.experimental import pallas as pl
from jax.experimental.pallas import tpu as pltpu

_NEG_BIG = -1e30  # acts as -inf for exp() without ever materializing inf/NaN


def _round_up(x, m):
    return ((x + m - 1) // m) * m


def _device_kind():
    try:
        return jax.devices()[0].device_kind.lower()
    except Exception:
        return ""


# ---------------------------------------------------------------------------
# Kernel 1: h = x @ W ; f1_i = h_i . a1 ; f2_i = h_i . a2   (row tile tm1)
# ---------------------------------------------------------------------------
def _proj_kernel(x_ref, w_ref, a1_ref, a2_ref, h_ref, f1_ref, f2_ref):
    h = jnp.dot(x_ref[...], w_ref[...], preferred_element_type=jnp.float32)
    h_ref[...] = h.astype(h_ref.dtype)          # bf16: MXU-native feed for kernel 2
    # logit halves computed from f32 h (VPU mul + lane reduce, free slots)
    f1_ref[...] = jnp.sum(h * a1_ref[...], axis=-1, keepdims=True)
    f2_ref[...] = jnp.sum(h * a2_ref[...], axis=-1, keepdims=True)


# ---------------------------------------------------------------------------
# Kernel 2: flash-style masked attention aggregation.
#   grid = (Nr/tm rows  [parallel],  Nc/tn neighbor tiles  [arbitrary])
#   per step: f1 (tm,1) f32, f2 (1,tn) f32, adj (tm,tn) int8,
#             h (resident (Npad,Dout) or per-tile (tn,Dout)) bf16
#   scratch : acc (tm,Dout) f32, rowsum (tm,1) f32, running max m (tm,1) f32
# ---------------------------------------------------------------------------
def _spattn_kernel(f1_ref, f2_ref, adj_ref, h_ref, o_ref,
                   acc_ref, rsum_ref, m_ref,
                   *, alpha, tn, h_resident, score_dtype):
    j = pl.program_id(1)

    @pl.when(j == 0)
    def _():
        acc_ref[...] = jnp.zeros_like(acc_ref)
        rsum_ref[...] = jnp.zeros_like(rsum_ref)
        m_ref[...] = jnp.full_like(m_ref, _NEG_BIG)

    if h_resident:
        # h lives fully in VMEM (constant-index BlockSpec): slice the current
        # neighbor tile instead of re-DMAing it for every row tile.
        start = pl.multiple_of(j * tn, tn)
        h_tile = h_ref[pl.ds(start, tn), :]
    else:
        h_tile = h_ref[...]

    edge = adj_ref[...] != 0                                  # int8, no upcast

    # score chain in score_dtype (bf16 on v6e/v7x, f32 on v5e)
    f1 = f1_ref[...].astype(score_dtype)                      # (tm, 1)
    f2 = f2_ref[...].astype(score_dtype)                      # (1, tn)
    s = f1 + f2                                               # (tm, tn) logits
    g = -jnp.maximum(s, alpha * s)                            # -leakyrelu(s)
    g = jnp.where(edge, g, _NEG_BIG)                          # mask BEFORE exp

    # online-max stabilization (the exp(m) factors cancel in the final divide)
    tile_max = jnp.max(g, axis=-1, keepdims=True).astype(jnp.float32)
    m_new = jnp.maximum(m_ref[...], tile_max)
    rescale = jnp.exp(m_ref[...] - m_new)                     # <= 1, f32
    # keep this where(): for rows with no edges in any processed tile,
    # g - m_new == 0 and exp gives 1 — the mask is what keeps non-edges at 0.
    p = jnp.where(edge, jnp.exp(g - m_new.astype(score_dtype)), 0.0)

    rsum_ref[...] = rescale * rsum_ref[...] + jnp.sum(
        p.astype(jnp.float32), axis=-1, keepdims=True)
    p_mx = p if p.dtype == jnp.bfloat16 else p.astype(jnp.bfloat16)
    acc_ref[...] = rescale * acc_ref[...] + jnp.dot(
        p_mx, h_tile, preferred_element_type=jnp.float32)
    m_ref[...] = m_new

    @pl.when(j == pl.num_programs(1) - 1)
    def _():
        rs = jnp.maximum(rsum_ref[...], 1e-30)   # zero-degree rows -> 0, not NaN
        r = pl.reciprocal(rs, approx=True)
        r = r * (2.0 - rs * r)                   # one Newton step -> ~f32 accuracy
        hp = acc_ref[...] * r
        # TODO(synk): `activation` is a constructor arg in the module; ELU
        # (the DHYPR default) is hard-wired here.  `return_attn=True` path is
        # not implemented.
        neg = jnp.exp(jnp.minimum(hp, 0.0)) - 1.0
        o_ref[...] = jnp.where(hp > 0, hp, neg)  # ELU


def _vmem_limit_bytes(tm, tn, dout, npad, h_resident, score_bytes, kind):
    """Right-size the scoped-VMEM request from the actual working set."""
    adj_buf = 2 * tm * tn * 1                                   # int8, 2 bufs
    h_buf = 2 * npad * dout * 2 if h_resident else 2 * tn * dout * 2
    out_buf = 2 * tm * dout * 4
    vec_buf = 2 * (tm * 4 + tn * 4)                             # f1 / f2 tiles
    scratch = tm * dout * 4 + 2 * tm * 4                        # acc, rsum, m
    temps = 6 * tm * tn * score_bytes                           # (tm,tn) live temps
    need = adj_buf + h_buf + out_buf + vec_buf + scratch + temps
    cap = (44 << 20) if "v7" in kind else (96 << 20)            # 64 MiB chip vs 128
    return int(min(max(int(need * 1.5), 32 << 20), cap))


# ---------------------------------------------------------------------------
# Wrapper
# ---------------------------------------------------------------------------
def spattn_forward(x, adj_mask, W, a, *, alpha=0.2, tm=256, tn=1024,
                   score_dtype=None):
    N, Din = x.shape
    Dout = W.shape[1]
    assert adj_mask.shape == (N, N)

    kind = _device_kind()
    if score_dtype is None:
        # bf16 VPU/EUP exists on v6e/v7x; keep f32 on v5e / unknown chips.
        score_dtype = jnp.bfloat16 if ("v6" in kind or "v7" in kind) else jnp.float32
    score_bytes = jnp.dtype(score_dtype).itemsize

    # --- tile sizing (clamped to the problem; rows/cols padded independently) ---
    tm = max(32, _round_up(tm, 32))            # int8 adj sublane tiling
    tn = max(128, _round_up(tn, 128))          # lane tiling
    tn = min(tn, _round_up(N, 128))
    tm = min(tm, _round_up(N, 32))
    # keep >= 2 row tiles so the "parallel" row axis can split across the
    # two TensorCores of a v7x chip
    while _round_up(N, tm) // tm < 2 and tm >= 64 and tm % 64 == 0:
        tm //= 2

    Nr = _round_up(N, tm)                      # padded row count (adj rows, output)
    Nc = _round_up(N, tn)                      # padded col count (adj cols)
    Npad = max(Nr, Nc)                         # node-array length (x, h, f1, f2)
    tm1 = 1024                                 # kernel-1 row tile: largest divisor
    while Npad % tm1 != 0:
        tm1 //= 2

    # Padded rows/cols have zero features and zero adjacency -> contribute 0
    # and are sliced off at the end.
    if Npad != N:
        x = jnp.pad(x, ((0, Npad - N), (0, 0)))
    adj_i8 = (adj_mask != 0).astype(jnp.int8)  # pattern only; 1 byte per edge slot
    if (Nr, Nc) != (N, N):
        adj_i8 = jnp.pad(adj_i8, ((0, Nr - N), (0, Nc - N)))

    a1 = a[:, :Dout]          # (1, Dout)
    a2 = a[:, Dout:]          # (1, Dout)

    # keep h fully VMEM-resident when it comfortably fits (kills the h re-fetch)
    h_resident = Npad * Dout * 2 <= 8 * 1024 * 1024

    cap = (44 << 20) if "v7" in kind else (96 << 20)
    vmem_k1 = min(32 << 20, cap)
    vmem_k2 = _vmem_limit_bytes(tm, tn, Dout, Npad, h_resident, score_bytes, kind)

    # ---- kernel 1: projection + logit halves ----
    h, f1, f2 = pl.pallas_call(
        _proj_kernel,
        out_shape=(jax.ShapeDtypeStruct((Npad, Dout), jnp.bfloat16),
                   jax.ShapeDtypeStruct((Npad, 1), jnp.float32),
                   jax.ShapeDtypeStruct((Npad, 1), jnp.float32)),
        grid_spec=pltpu.PrefetchScalarGridSpec(
            num_scalar_prefetch=0,
            grid=(Npad // tm1,),
            in_specs=[pl.BlockSpec((tm1, Din), lambda i: (i, 0)),
                      pl.BlockSpec((Din, Dout), lambda i: (0, 0)),
                      pl.BlockSpec((1, Dout), lambda i: (0, 0)),
                      pl.BlockSpec((1, Dout), lambda i: (0, 0))],
            out_specs=[pl.BlockSpec((tm1, Dout), lambda i: (i, 0)),
                       pl.BlockSpec((tm1, 1), lambda i: (i, 0)),
                       pl.BlockSpec((tm1, 1), lambda i: (i, 0))]),
        compiler_params=pltpu.CompilerParams(
            dimension_semantics=("parallel",),
            vmem_limit_bytes=vmem_k1),
    )(x, W, a1, a2)

    # f2 enters kernel 2 broadcast along the neighbor (lane) axis.
    f2_row = f2.T             # (1, Npad)

    if h_resident:
        h_spec = pl.BlockSpec((Npad, Dout), lambda i, j: (0, 0))   # resident
    else:
        h_spec = pl.BlockSpec((tn, Dout), lambda i, j: (j, 0))     # per col tile

    # ---- kernel 2: masked attention aggregation ----
    out = pl.pallas_call(
        functools.partial(_spattn_kernel, alpha=alpha, tn=tn,
                          h_resident=h_resident, score_dtype=score_dtype),
        out_shape=jax.ShapeDtypeStruct((Nr, Dout), jnp.float32),
        grid_spec=pltpu.PrefetchScalarGridSpec(
            num_scalar_prefetch=0,
            grid=(Nr // tm, Nc // tn),
            in_specs=[pl.BlockSpec((tm, 1), lambda i, j: (i, 0)),      # f1 rows
                      pl.BlockSpec((1, tn), lambda i, j: (0, j)),      # f2 cols
                      pl.BlockSpec((tm, tn), lambda i, j: (i, j)),     # adj tile
                      h_spec],                                         # h feed
            out_specs=pl.BlockSpec((tm, Dout), lambda i, j: (i, 0)),
            scratch_shapes=[pltpu.VMEM((tm, Dout), jnp.float32),       # acc
                            pltpu.VMEM((tm, 1), jnp.float32),          # rowsum
                            pltpu.VMEM((tm, 1), jnp.float32)]),        # running max
        compiler_params=pltpu.CompilerParams(
            dimension_semantics=("parallel", "arbitrary"),
            vmem_limit_bytes=vmem_k2),
    )(f1, f2_row, adj_i8, h)

    return out[:N]


# ---------------------------------------------------------------------------
# Pure-JAX reference (mirrors the PyTorch forward) for a correctness check
# ---------------------------------------------------------------------------
def spattn_reference(x, adj_mask, W, a, *, alpha=0.2):
    Dout = W.shape[1]
    h = x @ W
    f1 = h @ a[0, :Dout]
    f2 = h @ a[0, Dout:]
    s = f1[:, None] + f2[None, :]
    lrelu = jnp.where(s > 0, s, alpha * s)
    e = jnp.where(adj_mask != 0, jnp.exp(-lrelu), 0.0)
    rowsum = e.sum(-1, keepdims=True)
    hp = (e @ h) / rowsum
    return jax.nn.elu(hp)


if __name__ == "__main__":
    # Small but TPU-friendly shapes: lane-dense Dout=128 output, 2 row tiles.
    N, Din, Dout = 512, 64, 128
    alpha = 0.2

    key = jax.random.PRNGKey(0)
    kx, kw, ka, kadj = jax.random.split(key, 4)

    # Node features.
    x = jax.random.normal(kx, (N, Din), dtype=jnp.float32)

    # Parameters (xavier_normal_, gain=1.414 — as in the module __init__).
    std_w = 1.414 * (2.0 / (Din + Dout)) ** 0.5
    W = std_w * jax.random.normal(kw, (Din, Dout), dtype=jnp.float32)
    std_a = 1.414 * (2.0 / (1 + 2 * Dout)) ** 0.5
    a = std_a * jax.random.normal(ka, (1, 2 * Dout), dtype=jnp.float32)

    # Sparse COO adjacency -> dense 0/1 mask, with self-loops so every row has
    # at least one edge (matches how DHYPR feeds this layer).
    rand_edges = (jax.random.uniform(kadj, (N, N)) < 0.05).astype(jnp.float32)
    adj_mask = jnp.maximum(rand_edges, jnp.eye(N, dtype=jnp.float32))

    out = spattn_forward(x, adj_mask, W, a, alpha=alpha)
    out = jax.block_until_ready(out)

    ref = spattn_reference(x, adj_mask, W, a, alpha=alpha)
    assert out.shape == (N, Dout)
    assert bool(jnp.all(jnp.isfinite(out)))
    # h is stored in bf16, the e·h MXU feed is bf16 (f32 accumulation), and on
    # v6e/v7x the score chain runs in bf16 — compare against the f32 reference
    # with a correspondingly relaxed tolerance.
    assert jnp.allclose(out, ref, atol=5e-2, rtol=5e-2), "mismatch vs reference"

    print("KERNEL_OK")
</pallas_src>

<mosaic_0001>
module attributes {stable_mosaic.version = 11 : i64} {
  func.func @_proj_kernel(%arg0: i32, %arg1: memref<512x64xf32, #tpu.memory_space<vmem>>, %arg2: memref<64x128xf32, #tpu.memory_space<vmem>>, %arg3: memref<1x128xf32, #tpu.memory_space<vmem>>, %arg4: memref<1x128xf32, #tpu.memory_space<vmem>>, %arg5: memref<512x128xbf16, #tpu.memory_space<vmem>>, %arg6: memref<512x1xf32, #tpu.memory_space<vmem>>, %arg7: memref<512x1xf32, #tpu.memory_space<vmem>>) attributes {dimension_semantics = [#tpu.dimension_semantics<parallel>], iteration_bounds = array<i64: 1>, scalar_prefetch = 0 : i64, scratch_operands = 0 : i64, tpu.core_type = #tpu.core_type<tc>, window_params = [{transform_indices = @transform_0, window_bounds = array<i64: 512, 64>}, {pipeline_mode = #tpu.pipeline_mode<synchronous>, transform_indices = @transform_1, window_bounds = array<i64: 64, 128>}, {pipeline_mode = #tpu.pipeline_mode<synchronous>, transform_indices = @transform_2, window_bounds = array<i64: 1, 128>}, {pipeline_mode = #tpu.pipeline_mode<synchronous>, transform_indices = @transform_3, window_bounds = array<i64: 1, 128>}, {transform_indices = @transform_4, window_bounds = array<i64: 512, 128>}, {transform_indices = @transform_5, window_bounds = array<i64: 512, 1>}, {transform_indices = @transform_6, window_bounds = array<i64: 512, 1>}]} {
    %c0 = arith.constant 0 : index
    %c0_0 = arith.constant 0 : index
    %0 = vector.load %arg1[%c0, %c0_0] : memref<512x64xf32, #tpu.memory_space<vmem>>, vector<512x64xf32>
    %c0_1 = arith.constant 0 : index
    %c0_2 = arith.constant 0 : index
    %1 = vector.load %arg2[%c0_1, %c0_2] : memref<64x128xf32, #tpu.memory_space<vmem>>, vector<64x128xf32>
    %cst = arith.constant dense<0.000000e+00> : vector<512x128xf32>
    %2 = tpu.matmul %0, %1, %cst {dimension_numbers = #tpu.dot_dimension_numbers<[1], [0], [0], [1], [0, 0, 1, 1], [], []>} : vector<512x64xf32>, vector<64x128xf32>, vector<512x128xf32> -> vector<512x128xf32>
    %3 = arith.truncf %2 : vector<512x128xf32> to vector<512x128xbf16>
    %c0_3 = arith.constant 0 : index
    %c0_4 = arith.constant 0 : index
    %4 = vector.load %arg5[%c0_3, %c0_4] : memref<512x128xbf16, #tpu.memory_space<vmem>>, vector<512x128xbf16>
    tpu.vector_store %arg5[%c0_3, %c0_4], %3 {strides = array<i32>} : memref<512x128xbf16, #tpu.memory_space<vmem>>, vector<512x128xbf16>,
    %c0_5 = arith.constant 0 : index
    %c0_6 = arith.constant 0 : index
    %5 = vector.load %arg3[%c0_5, %c0_6] : memref<1x128xf32, #tpu.memory_space<vmem>>, vector<1x128xf32>
    %6 = vector.broadcast %5 : vector<1x128xf32> to vector<512x128xf32>
    %7 = arith.mulf %2, %6 : vector<512x128xf32>
    %cst_7 = arith.constant dense<0.000000e+00> : vector<512xf32>
    %8 = vector.multi_reduction <add>, %7, %cst_7 [1] : vector<512x128xf32> to vector<512xf32>
    %9 = vector.shape_cast %8 : vector<512xf32> to vector<512x1xf32>
    %c0_8 = arith.constant 0 : index
    %c0_9 = arith.constant 0 : index
    %10 = vector.load %arg6[%c0_8, %c0_9] : memref<512x1xf32, #tpu.memory_space<vmem>>, vector<512x1xf32>
    tpu.vector_store %arg6[%c0_8, %c0_9], %9 {strides = array<i32>} : memref<512x1xf32, #tpu.memory_space<vmem>>, vector<512x1xf32>,
    %c0_10 = arith.constant 0 : index
    %c0_11 = arith.constant 0 : index
    %11 = vector.load %arg4[%c0_10, %c0_11] : memref<1x128xf32, #tpu.memory_space<vmem>>, vector<1x128xf32>
    %12 = vector.broadcast %11 : vector<1x128xf32> to vector<512x128xf32>
    %13 = arith.mulf %2, %12 : vector<512x128xf32>
    %cst_12 = arith.constant dense<0.000000e+00> : vector<512xf32>
    %14 = vector.multi_reduction <add>, %13, %cst_12 [1] : vector<512x128xf32> to vector<512xf32>
    %15 = vector.shape_cast %14 : vector<512xf32> to vector<512x1xf32>
    %c0_13 = arith.constant 0 : index
    %c0_14 = arith.constant 0 : index
    %16 = vector.load %arg7[%c0_13, %c0_14] : memref<512x1xf32, #tpu.memory_space<vmem>>, vector<512x1xf32>
    tpu.vector_store %arg7[%c0_13, %c0_14], %15 {strides = array<i32>} : memref<512x1xf32, #tpu.memory_space<vmem>>, vector<512x1xf32>,
    return
  }
  func.func @transform_0(%arg0: i32) -> (i32, i32) {
    %c0_i32 = arith.constant 0 : i32
    %c0_i32_0 = arith.constant 0 : i32
    return %arg0, %c0_i32 : i32, i32
  }
  func.func @transform_1(%arg0: i32) -> (i32, i32) {
    %c0_i32 = arith.constant 0 : i32
    %c0_i32_0 = arith.constant 0 : i32
    %c0_i32_1 = arith.constant 0 : i32
    return %c0_i32, %c0_i32_0 : i32, i32
  }
  func.func @transform_2(%arg0: i32) -> (i32, i32) {
    %c0_i32 = arith.constant 0 : i32
    %c0_i32_0 = arith.constant 0 : i32
    %c0_i32_1 = arith.constant 0 : i32
    return %c0_i32, %c0_i32_0 : i32, i32
  }
  func.func @transform_3(%arg0: i32) -> (i32, i32) {
    %c0_i32 = arith.constant 0 : i32
    %c0_i32_0 = arith.constant 0 : i32
    %c0_i32_1 = arith.constant 0 : i32
    return %c0_i32, %c0_i32_0 : i32, i32
  }
  func.func @transform_4(%arg0: i32) -> (i32, i32) {
    %c0_i32 = arith.constant 0 : i32
    %c0_i32_0 = arith.constant 0 : i32
    return %arg0, %c0_i32 : i32, i32
  }
  func.func @transform_5(%arg0: i32) -> (i32, i32) {
    %c0_i32 = arith.constant 0 : i32
    %c0_i32_0 = arith.constant 0 : i32
    return %arg0, %c0_i32 : i32, i32
  }
  func.func @transform_6(%arg0: i32) -> (i32, i32) {
    %c0_i32 = arith.constant 0 : i32
    %c0_i32_0 = arith.constant 0 : i32
    return %arg0, %c0_i32 : i32, i32
  }
}

</mosaic_0001>

<llo_original>
// kernel: tpu_custom_call.1
$region0: #{tpu_custom_call.1}
  #allocation0 [shape = 'u32[]', space=smem, size = 0x4, offset = 0x4, fixed_abs, tag = 'smem constant byte address 0x4 - core index']
  #allocation1 [shape = 'u32[144,128]{1,0:T(1,128)}', space=vmem, size = 0x12000, scoped, tag = 'internal scratch']
  %s0 = inlined_call_operand.vmem [shape: f32[512,64], index: 0, kind: input, shape index: {}]
  %s1 = inlined_call_operand.vmem [shape: f32[64,128], index: 1, kind: input, shape index: {}]
  %s2 = inlined_call_operand.vmem [shape: f32[1,128], index: 2, kind: input, shape index: {}]
  %s3 = inlined_call_operand.vmem [shape: f32[1,128], index: 3, kind: input, shape index: {}]
  %s4 = inlined_call_operand.hbm [shape: bf16[512,128], index: 4, kind: output, shape index: {0}]
  %s5 = inlined_call_operand.vmem [shape: f32[512,1], index: 5, kind: output, shape index: {1}]
  %s6 = inlined_call_operand.vmem [shape: f32[512,1], index: 6, kind: output, shape index: {2}]
  %7 = xla_tuple %s4, %s5, %s6
  %s8 = sld [smem:[#allocation0]]
  $region42: #{tpu_custom_call.1} parent=0
    _
  %s10 = ssub.s32 1, %s8
  %s11 = scalar_select 0, %s10, %s8
  $region1: #{tpu_custom_call.1} parent=0
    #allocation2 [shape = 'u8[131072]{0}', space=vmem, size = 0x20000, scoped, tag = 'output window, operand 0, single buffered']
    #allocation3 [shape = 's32[1]{0}', space=sflag, size = 0x4, scoped, tag = 'scoped memory for tpu_custom_call.1']
    %12 = vsyncpa [#allocation3], 0
    // Predicated region
    $region2: #{tpu_custom_call.1} parent=1 // pred_check
      _
    $region3: #{tpu_custom_call.1} parent=1 // pred_check_branch
      %14 = sbr.rel (0) target = $region5
    $region4: #{tpu_custom_call.1} parent=1 // pred_region
      _
    $region5: #{tpu_custom_call.1} parent=1 // pred_fallthru
      _
    // Predicated region
    $region6: #{tpu_custom_call.1} parent=1 // pred_check
      _
    $region7: #{tpu_custom_call.1} parent=1 // pred_check_branch
      %16 = sbr.rel (0) target = $region9
    $region8: #{tpu_custom_call.1} parent=1 // pred_region
      _
    $region9: #{tpu_custom_call.1} parent=1 // pred_fallthru
      _
    // Predicated region
    $region10: #{tpu_custom_call.1} parent=1 // pred_check
      _
    $region11: #{tpu_custom_call.1} parent=1 // pred_check_branch
      %18 = sbr.rel (0) target = $region13
    $region12: #{tpu_custom_call.1} parent=1 // pred_region
      _
    $region13: #{tpu_custom_call.1} parent=1 // pred_fallthru
      _
    // Predicated region
    $region14: #{tpu_custom_call.1} parent=1 // pred_check
      _
    $region15: #{tpu_custom_call.1} parent=1 // pred_check_branch
      %20 = sbr.rel (0) target = $region17
    $region16: #{tpu_custom_call.1} parent=1 // pred_region
      _
    $region17: #{tpu_custom_call.1} parent=1 // pred_fallthru
      _
    %v21 = vld [vmem:[%s0] sm:$0xff]
    %v22 = vld [vmem:[%s0 + $0x8] sm:$0xff]
    %v23 = vld [vmem:[%s0 + $0x10] sm:$0xff]
    %v24 = vld [vmem:[%s0 + $0x18] sm:$0xff]
    %v25 = vld [vmem:[%s0 + $0x20] sm:$0xff]
    %v26 = vld [vmem:[%s0 + $0x28] sm:$0xff]
    %v27 = vld [vmem:[%s0 + $0x30] sm:$0xff]
    %v28 = vld [vmem:[%s0 + $0x38] sm:$0xff]
    %v29 = vld [vmem:[%s0 + $0x40] sm:$0xff]
    %v30 = vld [vmem:[%s0 + $0x48] sm:$0xff]
    %v31 = vld [vmem:[%s0 + $0x50] sm:$0xff]
    %v32 = vld [vmem:[%s0 + $0x58] sm:$0xff]
    %v33 = vld [vmem:[%s0 + $0x60] sm:$0xff]
    %v34 = vld [vmem:[%s0 + $0x68] sm:$0xff]
    %v35 = vld [vmem:[%s0 + $0x70] sm:$0xff]
    %v36 = vld [vmem:[%s0 + $0x78] sm:$0xff]
    %v37 = vld [vmem:[%s0 + $0x80] sm:$0xff]
    %v38 = vld [vmem:[%s0 + $0x88] sm:$0xff]
    %v39 = vld [vmem:[%s0 + $0x90] sm:$0xff]
    %v40 = vld [vmem:[%s0 + $0x98] sm:$0xff]
    %v41 = vld [vmem:[%s0 + $0xa0] sm:$0xff]
    %v42 = vld [vmem:[%s0 + $0xa8] sm:$0xff]
    %v43 = vld [vmem:[%s0 + $0xb0] sm:$0xff]
    %v44 = vld [vmem:[%s0 + $0xb8] sm:$0xff]
    %v45 = vld [vmem:[%s0 + $0xc0] sm:$0xff]
    %v46 = vld [vmem:[%s0 + $0xc8] sm:$0xff]
    %v47 = vld [vmem:[%s0 + $0xd0] sm:$0xff]
    %v48 = vld [vmem:[%s0 + $0xd8] sm:$0xff]
    %v49 = vld [vmem:[%s0 + $0xe0] sm:$0xff]
    %v50 = vld [vmem:[%s0 + $0xe8] sm:$0xff]
    %v51 = vld [vmem:[%s0 + $0xf0] sm:$0xff]
    %v52 = vld [vmem:[%s0 + $0xf8] sm:$0xff]
    %v53 = vld [vmem:[%s0 + $0x100] sm:$0xff]
    %v54 = vld [vmem:[%s0 + $0x108] sm:$0xff]
    %v55 = vld [vmem:[%s0 + $0x110] sm:$0xff]
    %v56 = vld [vmem:[%s0 + $0x118] sm:$0xff]
    %v57 = vld [vmem:[%s0 + $0x120] sm:$0xff]
    %v58 = vld [vmem:[%s0 + $0x128] sm:$0xff]
    %v59 = vld [vmem:[%s0 + $0x130] sm:$0xff]
    %v60 = vld [vmem:[%s0 + $0x138] sm:$0xff]
    %v61 = vld [vmem:[%s0 + $0x140] sm:$0xff]
    %v62 = vld [vmem:[%s0 + $0x148] sm:$0xff]
    %v63 = vld [vmem:[%s0 + $0x150] sm:$0xff]
    %v64 = vld [vmem:[%s0 + $0x158] sm:$0xff]
    %v65 = vld [vmem:[%s0 + $0x160] sm:$0xff]
    %v66 = vld [vmem:[%s0 + $0x168] sm:$0xff]
    %v67 = vld [vmem:[%s0 + $0x170] sm:$0xff]
    %v68 = vld [vmem:[%s0 + $0x178] sm:$0xff]
    %v69 = vld [vmem:[%s0 + $0x180] sm:$0xff]
    %v70 = vld [vmem:[%s0 + $0x188] sm:$0xff]
    %v71 = vld [vmem:[%s0 + $0x190] sm:$0xff]
    %v72 = vld [vmem:[%s0 + $0x198] sm:$0xff]
    %v73 = vld [vmem:[%s0 + $0x1a0] sm:$0xff]
    %v74 = vld [vmem:[%s0 + $0x1a8] sm:$0xff]
    %v75 = vld [vmem:[%s0 + $0x1b0] sm:$0xff]
    %v76 = vld [vmem:[%s0 + $0x1b8] sm:$0xff]
    %v77 = vld [vmem:[%s0 + $0x1c0] sm:$0xff]
    %v78 = vld [vmem:[%s0 + $0x1c8] sm:$0xff]
    %v79 = vld [vmem:[%s0 + $0x1d0] sm:$0xff]
    %v80 = vld [vmem:[%s0 + $0x1d8] sm:$0xff]
    %v81 = vld [vmem:[%s0 + $0x1e0] sm:$0xff]
    %v82 = vld [vmem:[%s0 + $0x1e8] sm:$0xff]
    %v83 = vld [vmem:[%s0 + $0x1f0] sm:$0xff]
    %v84 = vld [vmem:[%s0 + $0x1f8] sm:$0xff]
    %v85 = vld [vmem:[%s1] sm:$0xff]
    %v86 = vld [vmem:[%s1 + $0x8] sm:$0xff]
    %v87 = vld [vmem:[%s1 + $0x10] sm:$0xff]
    %v88 = vld [vmem:[%s1 + $0x18] sm:$0xff]
    %v89 = vld [vmem:[%s1 + $0x20] sm:$0xff]
    %v90 = vld [vmem:[%s1 + $0x28] sm:$0xff]
    %v91 = vld [vmem:[%s1 + $0x30] sm:$0xff]
    %v92 = vld [vmem:[%s1 + $0x38] sm:$0xff]
    %vm93 = vcmask 523264
    %v95 = vsel %vm93, %v21, 0
    %v98 = vsel %vm93, %v22, 0
    %v101 = vsel %vm93, %v23, 0
    %v104 = vsel %vm93, %v24, 0
    %v107 = vsel %vm93, %v25, 0
    %v110 = vsel %vm93, %v26, 0
    %v113 = vsel %vm93, %v27, 0
    %v116 = vsel %vm93, %v28, 0
    %v119 = vsel %vm93, %v29, 0
    %v122 = vsel %vm93, %v30, 0
    %v125 = vsel %vm93, %v31, 0
    %v128 = vsel %vm93, %v32, 0
    %v131 = vsel %vm93, %v33, 0
    %v134 = vsel %vm93, %v34, 0
    %v137 = vsel %vm93, %v35, 0
    %v140 = vsel %vm93, %v36, 0
    %v143 = vsel %vm93, %v37, 0
    %v146 = vsel %vm93, %v38, 0
    %v149 = vsel %vm93, %v39, 0
    %v152 = vsel %vm93, %v40, 0
    %v155 = vsel %vm93, %v41, 0
    %v158 = vsel %vm93, %v42, 0
    %v161 = vsel %vm93, %v43, 0
    %v164 = vsel %vm93, %v44, 0
    %v167 = vsel %vm93, %v45, 0
    %v170 = vsel %vm93, %v46, 0
    %v173 = vsel %vm93, %v47, 0
    %v176 = vsel %vm93, %v48, 0
    %v179 = vsel %vm93, %v49, 0
    %v182 = vsel %vm93, %v50, 0
    %v185 = vsel %vm93, %v51, 0
    %v188 = vsel %vm93, %v52, 0
    %v191 = vsel %vm93, %v53, 0
    %v194 = vsel %vm93, %v54, 0
    %v197 = vsel %vm93, %v55, 0
    %v200 = vsel %vm93, %v56, 0
    %v203 = vsel %vm93, %v57, 0
    %v206 = vsel %vm93, %v58, 0
    %v209 = vsel %vm93, %v59, 0
    %v212 = vsel %vm93, %v60, 0
    %v215 = vsel %vm93, %v61, 0
    %v218 = vsel %vm93, %v62, 0
    %v221 = vsel %vm93, %v63, 0
    %v224 = vsel %vm93, %v64, 0
    %v227 = vsel %vm93, %v65, 0
    %v230 = vsel %vm93, %v66, 0
    %v233 = vsel %vm93, %v67, 0
    %v236 = vsel %vm93, %v68, 0
    %v239 = vsel %vm93, %v69, 0
    %v242 = vsel %vm93, %v70, 0
    %v245 = vsel %vm93, %v71, 0
    %v248 = vsel %vm93, %v72, 0
    %v251 = vsel %vm93, %v73, 0
    %v254 = vsel %vm93, %v74, 0
    %v257 = vsel %vm93, %v75, 0
    %v260 = vsel %vm93, %v76, 0
    %v263 = vsel %vm93, %v77, 0
    %v266 = vsel %vm93, %v78, 0
    %v269 = vsel %vm93, %v79, 0
    %v272 = vsel %vm93, %v80, 0
    %v275 = vsel %vm93, %v81, 0
    %v278 = vsel %vm93, %v82, 0
    %v281 = vsel %vm93, %v83, 0
    %v284 = vsel %vm93, %v84, 0
    %286 = vmatprep.subr.mxu0 0.0
    %287 = vmatpush1.msra.mxu0 %v85
    %288 = vmatprep.subr.mxu0 0.0
    %289 = vmatpush1.msra.mxu0 %v86
    %290 = vmatprep.subr.mxu0 0.0
    %291 = vmatpush1.msra.mxu0 %v87
    %292 = vmatprep.subr.mxu0 0.0
    %293 = vmatpush1.msra.mxu0 %v88
    %294 = vmatprep.subr.mxu0 0.0
    %295 = vmatpush1.msra.mxu0 %v89
    %296 = vmatprep.subr.mxu0 0.0
    %297 = vmatpush1.msra.mxu0 %v90
    %298 = vmatprep.subr.mxu0 0.0
    %299 = vmatpush1.msra.mxu0 %v91
    %300 = vmatprep.subr.mxu0 0.0
    %301 = vmatpush1.msra.mxu0 %v92
    %302 = vmatprep.subr.mxu0 0.0
    %303 = vmatpush1.msra.mxu0 0.0
    %304 = vmatprep.subr.mxu0 0.0
    %305 = vmatpush1.msra.mxu0 0.0
    %306 = vmatprep.subr.mxu0 0.0
    %307 = vmatpush1.msra.mxu0 0.0
    %308 = vmatprep.subr.mxu0 0.0
    %309 = vmatpush1.msra.mxu0 0.0
    %310 = vmatprep.subr.mxu0 0.0
    %311 = vmatpush1.msra.mxu0 0.0
    %312 = vmatprep.subr.mxu0 0.0
    %313 = vmatpush1.msra.mxu0 0.0
    %314 = vmatprep.subr.mxu0 0.0
    %315 = vmatpush1.msra.mxu0 0.0
    %316 = vmatprep.subr.mxu0 0.0
    %317 = vmatpush1.msra.mxu0 0.0
    %318 = vmatprep.subr.mxu0 0.0
    %319 = vmatpush1.msra.mxu0 0.0
    %320 = vmatprep.subr.mxu0 0.0
    %321 = vmatpush1.msra.mxu0 0.0
    %322 = vmatprep.subr.mxu0 0.0
    %323 = vmatpush1.msra.mxu0 0.0
    %324 = vmatprep.subr.mxu0 0.0
    %325 = vmatpush1.msra.mxu0 0.0
    %326 = vmatprep.subr.mxu0 0.0
    %327 = vmatpush1.msra.mxu0 0.0
    %328 = vmatprep.subr.mxu0 0.0
    %329 = vmatpush1.msra.mxu0 0.0
    %330 = vmatprep.subr.mxu0 0.0
    %331 = vmatpush1.msra.mxu0 0.0
    %332 = vmatprep.subr.mxu0 0.0
    %333 = vmatpush1.msra.mxu0 0.0
    %334 = vmatprep.subr.mxu0 0.0
    %335 = vmatpush1.msra.mxu0 0.0
    %336 = vmatprep.subr.mxu0 0.0
    %337 = vmatpush1.msra.mxu0 0.0
    %338 = vmatprep.subr.mxu0 0.0
    %339 = vmatpush1.msra.mxu0 0.0
    %340 = vmatprep.subr.mxu0 0.0
    %341 = vmatpush1.msra.mxu0 0.0
    %342 = vmatprep.subr.mxu0 0.0
    %343 = vmatpush1.msra.mxu0 0.0
    %344 = vmatprep.subr.mxu0 0.0
    %345 = vmatpush1.msra.mxu0 0.0
    %346 = vmatprep.subr.mxu0 0.0
    %347 = vmatpush1.msra.mxu0 0.0
    %348 = vmatprep.subr.mxu0 0.0
    %349 = vmatpush1.msra.mxu0 0.0
    %350 = vmatprep.mubr.f32.mxu0 0.0
    %351 = vmatmul.mubr.f32.gmra.mrb[0].mxu0 %v95
    %v352 = vpop.f32.mrb[0].mxu0
    %v353 = vadd.f32 0.0, %v352
    %v354 = vpop.f32.mrb[0].mxu0
    %355 = vmatprep.mubr.f32.mxu0 0.0
    %356 = vmatmul.mubr.f32.gmra.mrb[0].mxu0 %v98
    %v357 = vpop.f32.mrb[0].mxu0
    %v358 = vadd.f32 0.0, %v357
    %v359 = vpop.f32.mrb[0].mxu0
    %360 = vmatprep.mubr.f32.mxu0 0.0
    %361 = vmatmul.mubr.f32.gmra.mrb[0].mxu0 %v101
    %v362 = vpop.f32.mrb[0].mxu0
    %v363 = vadd.f32 0.0, %v362
    %v364 = vpop.f32.mrb[0].mxu0
    %365 = vmatprep.mubr.f32.mxu0 0.0
    %366 = vmatmul.mubr.f32.gmra.mrb[0].mxu0 %v104
    %v367 = vpop.f32.mrb[0].mxu0
    %v368 = vadd.f32 0.0, %v367
    %v369 = vpop.f32.mrb[0].mxu0
    %370 = vmatprep.mubr.f32.mxu0 0.0
    %371 = vmatmul.mubr.f32.gmra.mrb[0].mxu0 %v107
    %v372 = vpop.f32.mrb[0].mxu0
    %v373 = vadd.f32 0.0, %v372
    %v374 = vpop.f32.mrb[0].mxu0
    %375 = vmatprep.mubr.f32.mxu0 0.0
    %376 = vmatmul.mubr.f32.gmra.mrb[0].mxu0 %v110
    %v377 = vpop.f32.mrb[0].mxu0
    %v378 = vadd.f32 0.0, %v377
    %v379 = vpop.f32.mrb[0].mxu0
    %380 = vmatprep.mubr.f32.mxu0 0.0
    %381 = vmatmul.mubr.f32.gmra.mrb[0].mxu0 %v113
    %v382 = vpop.f32.mrb[0].mxu0
    %v383 = vadd.f32 0.0, %v382
    %v384 = vpop.f32.mrb[0].mxu0
    %385 = vmatprep.mubr.f32.mxu0 0.0
    %386 = vmatmul.mubr.f32.gmra.mrb[0].mxu0 %v116
    %v387 = vpop.f32.mrb[0].mxu0
    %v388 = vadd.f32 0.0, %v387
    %v389 = vpop.f32.mrb[0].mxu0
    %390 = vmatprep.mubr.f32.mxu0 0.0
    %391 = vmatmul.mubr.f32.gmra.mrb[0].mxu0 %v119
    %v392 = vpop.f32.mrb[0].mxu0
    %v393 = vadd.f32 0.0, %v392
    %v394 = vpop.f32.mrb[0].mxu0
    %395 = vmatprep.mubr.f32.mxu0 0.0
    %396 = vmatmul.mubr.f32.gmra.mrb[0].mxu0 %v122
    %v397 = vpop.f32.mrb[0].mxu0
    %v398 = vadd.f32 0.0, %v397
    %v399 = vpop.f32.mrb[0].mxu0
    %400 = vmatprep.mubr.f32.mxu0 0.0
    %401 = vmatmul.mubr.f32.gmra.mrb[0].mxu0 %v125
    %v402 = vpop.f32.mrb[0].mxu0
    %v403 = vadd.f32 0.0, %v402
    %v404 = vpop.f32.mrb[0].mxu0
    %405 = vmatprep.mubr.f32.mxu0 0.0
    %406 = vmatmul.mubr.f32.gmra.mrb[0].mxu0 %v128
    %v407 = vpop.f32.mrb[0].mxu0
    %v408 = vadd.f32 0.0, %v407
    %v409 = vpop.f32.mrb[0].mxu0
    %410 = vmatprep.mubr.f32.mxu0 0.0
    %411 = vmatmul.mubr.f32.gmra.mrb[0].mxu0 %v131
    %v412 = vpop.f32.mrb[0].mxu0
    %v413 = vadd.f32 0.0, %v412
    %v414 = vpop.f32.mrb[0].mxu0
    %415 = vmatprep.mubr.f32.mxu0 0.0
    %416 = vmatmul.mubr.f32.gmra.mrb[0].mxu0 %v134
    %v417 = vpop.f32.mrb[0].mxu0
    %v418 = vadd.f32 0.0, %v417
    %v419 = vpop.f32.mrb[0].mxu0
    %420 = vmatprep.mubr.f32.mxu0 0.0
    %421 = vmatmul.mubr.f32.gmra.mrb[0].mxu0 %v137
    %v422 = vpop.f32.mrb[0].mxu0
    %v423 = vadd.f32 0.0, %v422
    %v424 = vpop.f32.mrb[0].mxu0
    %425 = vmatprep.mubr.f32.mxu0 0.0
    %426 = vmatmul.mubr.f32.gmra.mrb[0].mxu0 %v140
    %v427 = vpop.f32.mrb[0].mxu0
    %v428 = vadd.f32 0.0, %v427
    %v429 = vpop.f32.mrb[0].mxu0
    %430 = vmatprep.mubr.f32.mxu0 0.0
    %431 = vmatmul.mubr.f32.gmra.mrb[0].mxu0 %v143
    %v432 = vpop.f32.mrb[0].mxu0
    %v433 = vadd.f32 0.0, %v432
    %v434 = vpop.f32.mrb[0].mxu0
    %435 = vmatprep.mubr.f32.mxu0 0.0
    %436 = vmatmul.mubr.f32.gmra.mrb[0].mxu0 %v146
    %v437 = vpop.f32.mrb[0].mxu0
    %v438 = vadd.f32 0.0, %v437
    %v439 = vpop.f32.mrb[0].mxu0
    %440 = vmatprep.mubr.f32.mxu0 0.0
    %441 = vmatmul.mubr.f32.gmra.mrb[0].mxu0 %v149
    %v442 = vpop.f32.mrb[0].mxu0
    %v443 = vadd.f32 0.0, %v442
    %v444 = vpop.f32.mrb[0].mxu0
    %445 = vmatprep.mubr.f32.mxu0 0.0
    %446 = vmatmul.mubr.f32.gmra.mrb[0].mxu0 %v152
    %v447 = vpop.f32.mrb[0].mxu0
    %v448 = vadd.f32 0.0, %v447
    %v449 = vpop.f32.mrb[0].mxu0
    %450 = vmatprep.mubr.f32.mxu0 0.0
    %451 = vmatmul.mubr.f32.gmra.mrb[0].mxu0 %v155
    %v452 = vpop.f32.mrb[0].mxu0
    %v453 = vadd.f32 0.0, %v452
    %v454 = vpop.f32.mrb[0].mxu0
    %455 = vmatprep.mubr.f32.mxu0 0.0
    %456 = vmatmul.mubr.f32.gmra.mrb[0].mxu0 %v158
    %v457 = vpop.f32.mrb[0].mxu0
    %v458 = vadd.f32 0.0, %v457
    %v459 = vpop.f32.mrb[0].mxu0
    %460 = vmatprep.mubr.f32.mxu0 0.0
    %461 = vmatmul.mubr.f32.gmra.mrb[0].mxu0 %v161
    %v462 = vpop.f32.mrb[0].mxu0
    %v463 = vadd.f32 0.0, %v462
    %v464 = vpop.f32.mrb[0].mxu0
    %465 = vmatprep.mubr.f32.mxu0 0.0
    %466 = vmatmul.mubr.f32.gmra.mrb[0].mxu0 %v164
    %v467 = vpop.f32.mrb[0].mxu0
    %v468 = vadd.f32 0.0, %v467
    %v469 = vpop.f32.mrb[0].mxu0
    %470 = vmatprep.mubr.f32.mxu0 0.0
    %471 = vmatmul.mubr.f32.gmra.mrb[0].mxu0 %v167
    %v472 = vpop.f32.mrb[0].mxu0
    %v473 = vadd.f32 0.0, %v472
    %v474 = vpop.f32.mrb[0].mxu0
    %475 = vmatprep.mubr.f32.mxu0 0.0
    %476 = vmatmul.mubr.f32.gmra.mrb[0].mxu0 %v170
    %v477 = vpop.f32.mrb[0].mxu0
    %v478 = vadd.f32 0.0, %v477
    %v479 = vpop.f32.mrb[0].mxu0
    %480 = vmatprep.mubr.f32.mxu0 0.0
    %481 = vmatmul.mubr.f32.gmra.mrb[0].mxu0 %v173
    %v482 = vpop.f32.mrb[0].mxu0
    %v483 = vadd.f32 0.0, %v482
    %v484 = vpop.f32.mrb[0].mxu0
    %485 = vmatprep.mubr.f32.mxu0 0.0
    %486 = vmatmul.mubr.f32.gmra.mrb[0].mxu0 %v176
    %v487 = vpop.f32.mrb[0].mxu0
    %v488 = vadd.f32 0.0, %v487
    %v489 = vpop.f32.mrb[0].mxu0
    %490 = vmatprep.mubr.f32.mxu0 0.0
    %491 = vmatmul.mubr.f32.gmra.mrb[0].mxu0 %v179
    %v492 = vpop.f32.mrb[0].mxu0
    %v493 = vadd.f32 0.0, %v492
    %v494 = vpop.f32.mrb[0].mxu0
    %495 = vmatprep.mubr.f32.mxu0 0.0
    %496 = vmatmul.mubr.f32.gmra.mrb[0].mxu0 %v182
    %v497 = vpop.f32.mrb[0].mxu0
    %v498 = vadd.f32 0.0, %v497
    %v499 = vpop.f32.mrb[0].mxu0
    %500 = vmatprep.mubr.f32.mxu0 0.0
    %501 = vmatmul.mubr.f32.gmra.mrb[0].mxu0 %v185
    %v502 = vpop.f32.mrb[0].mxu0
    %v503 = vadd.f32 0.0, %v502
    %v504 = vpop.f32.mrb[0].mxu0
    %505 = vmatprep.mubr.f32.mxu0 0.0
    %506 = vmatmul.mubr.f32.gmra.mrb[0].mxu0 %v188
    %v507 = vpop.f32.mrb[0].mxu0
    %v508 = vadd.f32 0.0, %v507
    %v509 = vpop.f32.mrb[0].mxu0
    %510 = vmatprep.mubr.f32.mxu0 0.0
    %511 = vmatmul.mubr.f32.gmra.mrb[0].mxu0 %v191
    %v512 = vpop.f32.mrb[0].mxu0
    %v513 = vadd.f32 0.0, %v512
    %v514 = vpop.f32.mrb[0].mxu0
    %515 = vmatprep.mubr.f32.mxu0 0.0
    %516 = vmatmul.mubr.f32.gmra.mrb[0].mxu0 %v194
    %v517 = vpop.f32.mrb[0].mxu0
    %v518 = vadd.f32 0.0, %v517
    %v519 = vpop.f32.mrb[0].mxu0
    %520 = vmatprep.mubr.f32.mxu0 0.0
    %521 = vmatmul.mubr.f32.gmra.mrb[0].mxu0 %v197
    %v522 = vpop.f32.mrb[0].mxu0
    %v523 = vadd.f32 0.0, %v522
    %v524 = vpop.f32.mrb[0].mxu0
    %525 = vmatprep.mubr.f32.mxu0 0.0
    %526 = vmatmul.mubr.f32.gmra.mrb[0].mxu0 %v200
    %v527 = vpop.f32.mrb[0].mxu0
    %v528 = vadd.f32 0.0, %v527
    %v529 = vpop.f32.mrb[0].mxu0
    %530 = vmatprep.mubr.f32.mxu0 0.0
    %531 = vmatmul.mubr.f32.gmra.mrb[0].mxu0 %v203
    %v532 = vpop.f32.mrb[0].mxu0
    %v533 = vadd.f32 0.0, %v532
    %v534 = vpop.f32.mrb[0].mxu0
    %535 = vmatprep.mubr.f32.mxu0 0.0
    %536 = vmatmul.mubr.f32.gmra.mrb[0].mxu0 %v206
    %v537 = vpop.f32.mrb[0].mxu0
    %v538 = vadd.f32 0.0, %v537
    %v539 = vpop.f32.mrb[0].mxu0
    %540 = vmatprep.mubr.f32.mxu0 0.0
    %541 = vmatmul.mubr.f32.gmra.mrb[0].mxu0 %v209
    %v542 = vpop.f32.mrb[0].mxu0
    %v543 = vadd.f32 0.0, %v542
    %v544 = vpop.f32.mrb[0].mxu0
    %545 = vmatprep.mubr.f32.mxu0 0.0
    %546 = vmatmul.mubr.f32.gmra.mrb[0].mxu0 %v212
    %v547 = vpop.f32.mrb[0].mxu0
    %v548 = vadd.f32 0.0, %v547
    %v549 = vpop.f32.mrb[0].mxu0
    %550 = vmatprep.mubr.f32.mxu0 0.0
    %551 = vmatmul.mubr.f32.gmra.mrb[0].mxu0 %v215
    %v552 = vpop.f32.mrb[0].mxu0
    %v553 = vadd.f32 0.0, %v552
    %v554 = vpop.f32.mrb[0].mxu0
    %555 = vmatprep.mubr.f32.mxu0 0.0
    %556 = vmatmul.mubr.f32.gmra.mrb[0].mxu0 %v218
    %v557 = vpop.f32.mrb[0].mxu0
    %v558 = vadd.f32 0.0, %v557
    %v559 = vpop.f32.mrb[0].mxu0
    %560 = vmatprep.mubr.f32.mxu0 0.0
    %561 = vmatmul.mubr.f32.gmra.mrb[0].mxu0 %v221
    %v562 = vpop.f32.mrb[0].mxu0
    %v563 = vadd.f32 0.0, %v562
    %v564 = vpop.f32.mrb[0].mxu0
    %565 = vmatprep.mubr.f32.mxu0 0.0
    %566 = vmatmul.mubr.f32.gmra.mrb[0].mxu0 %v224
    %v567 = vpop.f32.mrb[0].mxu0
    %v568 = vadd.f32 0.0, %v567
    %v569 = vpop.f32.mrb[0].mxu0
    %570 = vmatprep.mubr.f32.mxu0 0.0
    %571 = vmatmul.mubr.f32.gmra.mrb[0].mxu0 %v227
    %v572 = vpop.f32.mrb[0].mxu0
    %v573 = vadd.f32 0.0, %v572
    %v574 = vpop.f32.mrb[0].mxu0
    %575 = vmatprep.mubr.f32.mxu0 0.0
    %576 = vmatmul.mubr.f32.gmra.mrb[0].mxu0 %v230
    %v577 = vpop.f32.mrb[0].mxu0
    %v578 = vadd.f32 0.0, %v577
    %v579 = vpop.f32.mrb[0].mxu0
    %580 = vmatprep.mubr.f32.mxu0 0.0
    %581 = vmatmul.mubr.f32.gmra.mrb[0].mxu0 %v233
    %v582 = vpop.f32.mrb[0].mxu0
    %v583 = vadd.f32 0.0, %v582
    %v584 = vpop.f32.mrb[0].mxu0
    %585 = vmatprep.mubr.f32.mxu0 0.0
    %586 = vmatmul.mubr.f32.gmra.mrb[0].mxu0 %v236
    %v587 = vpop.f32.mrb[0].mxu0
    %v588 = vadd.f32 0.0, %v587
    %v589 = vpop.f32.mrb[0].mxu0
    %590 = vmatprep.mubr.f32.mxu0 0.0
    %591 = vmatmul.mubr.f32.gmra.mrb[0].mxu0 %v239
    %v592 = vpop.f32.mrb[0].mxu0
    %v593 = vadd.f32 0.0, %v592
    %v594 = vpop.f32.mrb[0].mxu0
    %595 = vmatprep.mubr.f32.mxu0 0.0
    %596 = vmatmul.mubr.f32.gmra.mrb[0].mxu0 %v242
    %v597 = vpop.f32.mrb[0].mxu0
    %v598 = vadd.f32 0.0, %v597
    %v599 = vpop.f32.mrb[0].mxu0
    %600 = vmatprep.mubr.f32.mxu0 0.0
    %601 = vmatmul.mubr.f32.gmra.mrb[0].mxu0 %v245
    %v602 = vpop.f32.mrb[0].mxu0
    %v603 = vadd.f32 0.0, %v602
    %v604 = vpop.f32.mrb[0].mxu0
    %605 = vmatprep.mubr.f32.mxu0 0.0
    %606 = vmatmul.mubr.f32.gmra.mrb[0].mxu0 %v248
    %v607 = vpop.f32.mrb[0].mxu0
    %v608 = vadd.f32 0.0, %v607
    %v609 = vpop.f32.mrb[0].mxu0
    %610 = vmatprep.mubr.f32.mxu0 0.0
    %611 = vmatmul.mubr.f32.gmra.mrb[0].mxu0 %v251
    %v612 = vpop.f32.mrb[0].mxu0
    %v613 = vadd.f32 0.0, %v612
    %v614 = vpop.f32.mrb[0].mxu0
    %615 = vmatprep.mubr.f32.mxu0 0.0
    %616 = vmatmul.mubr.f32.gmra.mrb[0].mxu0 %v254
    %v617 = vpop.f32.mrb[0].mxu0
    %v618 = vadd.f32 0.0, %v617
    %v619 = vpop.f32.mrb[0].mxu0
    %620 = vmatprep.mubr.f32.mxu0 0.0
    %621 = vmatmul.mubr.f32.gmra.mrb[0].mxu0 %v257
    %v622 = vpop.f32.mrb[0].mxu0
    %v623 = vadd.f32 0.0, %v622
    %v624 = vpop.f32.mrb[0].mxu0
    %625 = vmatprep.mubr.f32.mxu0 0.0
    %626 = vmatmul.mubr.f32.gmra.mrb[0].mxu0 %v260
    %v627 = vpop.f32.mrb[0].mxu0
    %v628 = vadd.f32 0.0, %v627
    %v629 = vpop.f32.mrb[0].mxu0
    %630 = vmatprep.mubr.f32.mxu0 0.0
    %631 = vmatmul.mubr.f32.gmra.mrb[0].mxu0 %v263
    %v632 = vpop.f32.mrb[0].mxu0
    %v633 = vadd.f32 0.0, %v632
    %v634 = vpop.f32.mrb[0].mxu0
    %635 = vmatprep.mubr.f32.mxu0 0.0
    %636 = vmatmul.mubr.f32.gmra.mrb[0].mxu0 %v266
    %v637 = vpop.f32.mrb[0].mxu0
    %v638 = vadd.f32 0.0, %v637
    %v639 = vpop.f32.mrb[0].mxu0
    %640 = vmatprep.mubr.f32.mxu0 0.0
    %641 = vmatmul.mubr.f32.gmra.mrb[0].mxu0 %v269
    %v642 = vpop.f32.mrb[0].mxu0
    %v643 = vadd.f32 0.0, %v642
    %v644 = vpop.f32.mrb[0].mxu0
    %645 = vmatprep.mubr.f32.mxu0 0.0
    %646 = vmatmul.mubr.f32.gmra.mrb[0].mxu0 %v272
    %v647 = vpop.f32.mrb[0].mxu0
    %v648 = vadd.f32 0.0, %v647
    %v649 = vpop.f32.mrb[0].mxu0
    %650 = vmatprep.mubr.f32.mxu0 0.0
    %651 = vmatmul.mubr.f32.gmra.mrb[0].mxu0 %v275
    %v652 = vpop.f32.mrb[0].mxu0
    %v653 = vadd.f32 0.0, %v652
    %v654 = vpop.f32.mrb[0].mxu0
    %655 = vmatprep.mubr.f32.mxu0 0.0
    %656 = vmatmul.mubr.f32.gmra.mrb[0].mxu0 %v278
    %v657 = vpop.f32.mrb[0].mxu0
    %v658 = vadd.f32 0.0, %v657
    %v659 = vpop.f32.mrb[0].mxu0
    %660 = vmatprep.mubr.f32.mxu0 0.0
    %661 = vmatmul.mubr.f32.gmra.mrb[0].mxu0 %v281
    %v662 = vpop.f32.mrb[0].mxu0
    %v663 = vadd.f32 0.0, %v662
    %v664 = vpop.f32.mrb[0].mxu0
    %665 = vmatprep.mubr.f32.mxu0 0.0
    %666 = vmatmul.mubr.f32.gmra.mrb[0].mxu0 %v284
    %v667 = vpop.f32.mrb[0].mxu0
    %v668 = vadd.f32 0.0, %v667
    %v669 = vpop.f32.mrb[0].mxu0
    %670 = vdwg.mxu0
    %v671 = vpack.c.bf16 %v358, %v353
    %v672 = vpack.c.bf16 %v368, %v363
    %v673 = vpack.c.bf16 %v378, %v373
    %v674 = vpack.c.bf16 %v388, %v383
    %v675 = vpack.c.bf16 %v398, %v393
    %v676 = vpack.c.bf16 %v408, %v403
    %v677 = vpack.c.bf16 %v418, %v413
    %v678 = vpack.c.bf16 %v428, %v423
    %v679 = vpack.c.bf16 %v438, %v433
    %v680 = vpack.c.bf16 %v448, %v443
    %v681 = vpack.c.bf16 %v458, %v453
    %v682 = vpack.c.bf16 %v468, %v463
    %v683 = vpack.c.bf16 %v478, %v473
    %v684 = vpack.c.bf16 %v488, %v483
    %v685 = vpack.c.bf16 %v498, %v493
    %v686 = vpack.c.bf16 %v508, %v503
    %v687 = vpack.c.bf16 %v518, %v513
    %v688 = vpack.c.bf16 %v528, %v523
    %v689 = vpack.c.bf16 %v538, %v533
    %v690 = vpack.c.bf16 %v548, %v543
    %v691 = vpack.c.bf16 %v558, %v553
    %v692 = vpack.c.bf16 %v568, %v563
    %v693 = vpack.c.bf16 %v578, %v573
    %v694 = vpack.c.bf16 %v588, %v583
    %v695 = vpack.c.bf16 %v598, %v593
    %v696 = vpack.c.bf16 %v608, %v603
    %v697 = vpack.c.bf16 %v618, %v613
    %v698 = vpack.c.bf16 %v628, %v623
    %v699 = vpack.c.bf16 %v638, %v633
    %v700 = vpack.c.bf16 %v648, %v643
    %v701 = vpack.c.bf16 %v658, %v653
    %v702 = vpack.c.bf16 %v668, %v663
    %v735 = vunpack.c.l.b16 %v671
    %v736 = vunpack.c.h.b16 %v671
    %v737 = vunpack.c.l.b16 %v672
    %v738 = vunpack.c.h.b16 %v672
    %v739 = vunpack.c.l.b16 %v673
    %v740 = vunpack.c.h.b16 %v673
    %v741 = vunpack.c.l.b16 %v674
    %v742 = vunpack.c.h.b16 %v674
    %v743 = vunpack.c.l.b16 %v675
    %v744 = vunpack.c.h.b16 %v675
    %v745 = vunpack.c.l.b16 %v676
    %v746 = vunpack.c.h.b16 %v676
    %v747 = vunpack.c.l.b16 %v677
    %v748 = vunpack.c.h.b16 %v677
    %v749 = vunpack.c.l.b16 %v678
    %v750 = vunpack.c.h.b16 %v678
    %v751 = vunpack.c.l.b16 %v679
    %v752 = vunpack.c.h.b16 %v679
    %v753 = vunpack.c.l.b16 %v680
    %v754 = vunpack.c.h.b16 %v680
    %v755 = vunpack.c.l.b16 %v681
    %v756 = vunpack.c.h.b16 %v681
    %v757 = vunpack.c.l.b16 %v682
    %v758 = vunpack.c.h.b16 %v682
    %v759 = vunpack.c.l.b16 %v683
    %v760 = vunpack.c.h.b16 %v683
    %v761 = vunpack.c.l.b16 %v684
    %v762 = vunpack.c.h.b16 %v684
    %v763 = vunpack.c.l.b16 %v685
    %v764 = vunpack.c.h.b16 %v685
    %v765 = vunpack.c.l.b16 %v686
    %v766 = vunpack.c.h.b16 %v686
    %v767 = vunpack.c.l.b16 %v687
    %v768 = vunpack.c.h.b16 %v687
    %v769 = vunpack.c.l.b16 %v688
    %v770 = vunpack.c.h.b16 %v688
    %v771 = vunpack.c.l.b16 %v689
    %v772 = vunpack.c.h.b16 %v689
    %v773 = vunpack.c.l.b16 %v690
    %v774 = vunpack.c.h.b16 %v690
    %v775 = vunpack.c.l.b16 %v691
    %v776 = vunpack.c.h.b16 %v691
    %v777 = vunpack.c.l.b16 %v692
    %v778 = vunpack.c.h.b16 %v692
    %v779 = vunpack.c.l.b16 %v693
    %v780 = vunpack.c.h.b16 %v693
    %v781 = vunpack.c.l.b16 %v694
    %v782 = vunpack.c.h.b16 %v694
    %v783 = vunpack.c.l.b16 %v695
    %v784 = vunpack.c.h.b16 %v695
    %v785 = vunpack.c.l.b16 %v696
    %v786 = vunpack.c.h.b16 %v696
    %v787 = vunpack.c.l.b16 %v697
    %v788 = vunpack.c.h.b16 %v697
    %v789 = vunpack.c.l.b16 %v698
    %v790 = vunpack.c.h.b16 %v698
    %v791 = vunpack.c.l.b16 %v699
    %v792 = vunpack.c.h.b16 %v699
    %v793 = vunpack.c.l.b16 %v700
    %v794 = vunpack.c.h.b16 %v700
    %v795 = vunpack.c.l.b16 %v701
    %v796 = vunpack.c.h.b16 %v701
    %v797 = vunpack.c.l.b16 %v702
    %v798 = vunpack.c.h.b16 %v702
    %v799 = vpack.c.b16 %v735, %v735
    %v800 = vpack.c.b16 %v736, %v736
    %v801 = vpack.c.b16 %v737, %v737
    %v802 = vpack.c.b16 %v738, %v738
    %v803 = vpack.c.b16 %v739, %v739
    %v804 = vpack.c.b16 %v740, %v740
    %v805 = vpack.c.b16 %v741, %v741
    %v806 = vpack.c.b16 %v742, %v742
    %v807 = vpack.c.b16 %v743, %v743
    %v808 = vpack.c.b16 %v744, %v744
    %v809 = vpack.c.b16 %v745, %v745
    %v810 = vpack.c.b16 %v746, %v746
    %v811 = vpack.c.b16 %v747, %v747
    %v812 = vpack.c.b16 %v748, %v748
    %v813 = vpack.c.b16 %v749, %v749
    %v814 = vpack.c.b16 %v750, %v750
    %v815 = vpack.c.b16 %v751, %v751
    %v816 = vpack.c.b16 %v752, %v752
    %v817 = vpack.c.b16 %v753, %v753
    %v818 = vpack.c.b16 %v754, %v754
    %v819 = vpack.c.b16 %v755, %v755
    %v820 = vpack.c.b16 %v756, %v756
    %v821 = vpack.c.b16 %v757, %v757
    %v822 = vpack.c.b16 %v758, %v758
    %v823 = vpack.c.b16 %v759, %v759
    %v824 = vpack.c.b16 %v760, %v760
    %v825 = vpack.c.b16 %v761, %v761
    %v826 = vpack.c.b16 %v762, %v762
    %v827 = vpack.c.b16 %v763, %v763
    %v828 = vpack.c.b16 %v764, %v764
    %v829 = vpack.c.b16 %v765, %v765
    %v830 = vpack.c.b16 %v766, %v766
    %v831 = vpack.c.b16 %v767, %v767
    %v832 = vpack.c.b16 %v768, %v768
    %v833 = vpack.c.b16 %v769, %v769
    %v834 = vpack.c.b16 %v770, %v770
    %v835 = vpack.c.b16 %v771, %v771
    %v836 = vpack.c.b16 %v772, %v772
    %v837 = vpack.c.b16 %v773, %v773
    %v838 = vpack.c.b16 %v774, %v774
    %v839 = vpack.c.b16 %v775, %v775
    %v840 = vpack.c.b16 %v776, %v776
    %v841 = vpack.c.b16 %v777, %v777
    %v842 = vpack.c.b16 %v778, %v778
    %v843 = vpack.c.b16 %v779, %v779
    %v844 = vpack.c.b16 %v780, %v780
    %v845 = vpack.c.b16 %v781, %v781
    %v846 = vpack.c.b16 %v782, %v782
    %v847 = vpack.c.b16 %v783, %v783
    %v848 = vpack.c.b16 %v784, %v784
    %v849 = vpack.c.b16 %v785, %v785
    %v850 = vpack.c.b16 %v786, %v786
    %v851 = vpack.c.b16 %v787, %v787
    %v852 = vpack.c.b16 %v788, %v788
    %v853 = vpack.c.b16 %v789, %v789
    %v854 = vpack.c.b16 %v790, %v790
    %v855 = vpack.c.b16 %v791, %v791
    %v856 = vpack.c.b16 %v792, %v792
    %v857 = vpack.c.b16 %v793, %v793
    %v858 = vpack.c.b16 %v794, %v794
    %v859 = vpack.c.b16 %v795, %v795
    %v860 = vpack.c.b16 %v796, %v796
    %v861 = vpack.c.b16 %v797, %v797
    %v862 = vpack.c.b16 %v798, %v798
    %927 = vst [vmem:[#allocation2] sm:$0xf] %v799
    %928 = vst [vmem:[#allocation2 + $0x4] sm:$0xf] %v800
    %929 = vst [vmem:[#allocation2 + $0x8] sm:$0xf] %v801
    %930 = vst [vmem:[#allocation2 + $0xc] sm:$0xf] %v802
    %931 = vst [vmem:[#allocation2 + $0x10] sm:$0xf] %v803
    %932 = vst [vmem:[#allocation2 + $0x14] sm:$0xf] %v804
    %933 = vst [vmem:[#allocation2 + $0x18] sm:$0xf] %v805
    %934 = vst [vmem:[#allocation2 + $0x1c] sm:$0xf] %v806
    %935 = vst [vmem:[#allocation2 + $0x20] sm:$0xf] %v807
    %936 = vst [vmem:[#allocation2 + $0x24] sm:$0xf] %v808
    %937 = vst [vmem:[#allocation2 + $0x28] sm:$0xf] %v809
    %938 = vst [vmem:[#allocation2 + $0x2c] sm:$0xf] %v810
    %939 = vst [vmem:[#allocation2 + $0x30] sm:$0xf] %v811
    %940 = vst [vmem:[#allocation2 + $0x34] sm:$0xf] %v812
    %941 = vst [vmem:[#allocation2 + $0x38] sm:$0xf] %v813
    %942 = vst [vmem:[#allocation2 + $0x3c] sm:$0xf] %v814
    %943 = vst [vmem:[#allocation2 + $0x40] sm:$0xf] %v815
    %944 = vst [vmem:[#allocation2 + $0x44] sm:$0xf] %v816
    %945 = vst [vmem:[#allocation2 + $0x48] sm:$0xf] %v817
    %946 = vst [vmem:[#allocation2 + $0x4c] sm:$0xf] %v818
    %947 = vst [vmem:[#allocation2 + $0x50] sm:$0xf] %v819
    %948 = vst [vmem:[#allocation2 + $0x54] sm:$0xf] %v820
    %949 = vst [vmem:[#allocation2 + $0x58] sm:$0xf] %v821
    %950 = vst [vmem:[#allocation2 + $0x5c] sm:$0xf] %v822
    %951 = vst [vmem:[#allocation2 + $0x60] sm:$0xf] %v823
    %952 = vst [vmem:[#allocation2 + $0x64] sm:$0xf] %v824
    %953 = vst [vmem:[#allocation2 + $0x68] sm:$0xf] %v825
    %954 = vst [vmem:[#allocation2 + $0x6c] sm:$0xf] %v826
    %955 = vst [vmem:[#allocation2 + $0x70] sm:$0xf] %v827
    %956 = vst [vmem:[#allocation2 + $0x74] sm:$0xf] %v828
    %957 = vst [vmem:[#allocation2 + $0x78] sm:$0xf] %v829
    %958 = vst [vmem:[#allocation2 + $0x7c] sm:$0xf] %v830
    %959 = vst [vmem:[#allocation2 + $0x80] sm:$0xf] %v831
    %960 = vst [vmem:[#allocation2 + $0x84] sm:$0xf] %v832
    %961 = vst [vmem:[#allocation2 + $0x88] sm:$0xf] %v833
    %962 = vst [vmem:[#allocation2 + $0x8c] sm:$0xf] %v834
    %963 = vst [vmem:[#allocation2 + $0x90] sm:$0xf] %v835
    %964 = vst [vmem:[#allocation2 + $0x94] sm:$0xf] %v836
    %965 = vst [vmem:[#allocation2 + $0x98] sm:$0xf] %v837
    %966 = vst [vmem:[#allocation2 + $0x9c] sm:$0xf] %v838
    %967 = vst [vmem:[#allocation2 + $0xa0] sm:$0xf] %v839
    %968 = vst [vmem:[#allocation2 + $0xa4] sm:$0xf] %v840
    %969 = vst [vmem:[#allocation2 + $0xa8] sm:$0xf] %v841
    %970 = vst [vmem:[#allocation2 + $0xac] sm:$0xf] %v842
    %971 = vst [vmem:[#allocation2 + $0xb0] sm:$0xf] %v843
    %972 = vst [vmem:[#allocation2 + $0xb4] sm:$0xf] %v844
    %973 = vst [vmem:[#allocation2 + $0xb8] sm:$0xf] %v845
    %974 = vst [vmem:[#allocation2 + $0xbc] sm:$0xf] %v846
    %975 = vst [vmem:[#allocation2 + $0xc0] sm:$0xf] %v847
    %976 = vst [vmem:[#allocation2 + $0xc4] sm:$0xf] %v848
    %977 = vst [vmem:[#allocation2 + $0xc8] sm:$0xf] %v849
    %978 = vst [vmem:[#allocation2 + $0xcc] sm:$0xf] %v850
    %979 = vst [vmem:[#allocation2 + $0xd0] sm:$0xf] %v851
    %980 = vst [vmem:[#allocation2 + $0xd4] sm:$0xf] %v852
    %981 = vst [vmem:[#allocation2 + $0xd8] sm:$0xf] %v853
    %982 = vst [vmem:[#allocation2 + $0xdc] sm:$0xf] %v854
    %983 = vst [vmem:[#allocation2 + $0xe0] sm:$0xf] %v855
    %984 = vst [vmem:[#allocation2 + $0xe4] sm:$0xf] %v856
    %985 = vst [vmem:[#allocation2 + $0xe8] sm:$0xf] %v857
    %986 = vst [vmem:[#allocation2 + $0xec] sm:$0xf] %v858
    %987 = vst [vmem:[#allocation2 + $0xf0] sm:$0xf] %v859
    %988 = vst [vmem:[#allocation2 + $0xf4] sm:$0xf] %v860
    %989 = vst [vmem:[#allocation2 + $0xf8] sm:$0xf] %v861
    %990 = vst [vmem:[#allocation2 + $0xfc] sm:$0xf] %v862
    %v991 = vld [vmem:[%s2] sm:$0x1]
    %v993 = vlaneseq
    %v994 = vshrl.u32 %v993, 7
    %v995 = vsub.s32 0, %v994
    %v996 = vrot.slane %v991, %v995
    %v998 = vmul.f32 %v353, %v996
    %v999 = vmul.f32 %v358, %v996
    %v1000 = vmul.f32 %v363, %v996
    %v1001 = vmul.f32 %v368, %v996
    %v1002 = vmul.f32 %v373, %v996
    %v1003 = vmul.f32 %v378, %v996
    %v1004 = vmul.f32 %v383, %v996
    %v1005 = vmul.f32 %v388, %v996
    %v1006 = vmul.f32 %v393, %v996
    %v1007 = vmul.f32 %v398, %v996
    %v1008 = vmul.f32 %v403, %v996
    %v1009 = vmul.f32 %v408, %v996
    %v1010 = vmul.f32 %v413, %v996
    %v1011 = vmul.f32 %v418, %v996
    %v1012 = vmul.f32 %v423, %v996
    %v1013 = vmul.f32 %v428, %v996
    %v1014 = vmul.f32 %v433, %v996
    %v1015 = vmul.f32 %v438, %v996
    %v1016 = vmul.f32 %v443, %v996
    %v1017 = vmul.f32 %v448, %v996
    %v1018 = vmul.f32 %v453, %v996
    %v1019 = vmul.f32 %v458, %v996
    %v1020 = vmul.f32 %v463, %v996
    %v1021 = vmul.f32 %v468, %v996
    %v1022 = vmul.f32 %v473, %v996
    %v1023 = vmul.f32 %v478, %v996
    %v1024 = vmul.f32 %v483, %v996
    %v1025 = vmul.f32 %v488, %v996
    %v1026 = vmul.f32 %v493, %v996
    %v1027 = vmul.f32 %v498, %v996
    %v1028 = vmul.f32 %v503, %v996
    %v1029 = vmul.f32 %v508, %v996
    %v1030 = vmul.f32 %v513, %v996
    %v1031 = vmul.f32 %v518, %v996
    %v1032 = vmul.f32 %v523, %v996
    %v1033 = vmul.f32 %v528, %v996
    %v1034 = vmul.f32 %v533, %v996
    %v1035 = vmul.f32 %v538, %v996
    %v1036 = vmul.f32 %v543, %v996
    %v1037 = vmul.f32 %v548, %v996
    %v1038 = vmul.f32 %v553, %v996
    %v1039 = vmul.f32 %v558, %v996
    %v1040 = vmul.f32 %v563, %v996
    %v1041 = vmul.f32 %v568, %v996
    %v1042 = vmul.f32 %v573, %v996
    %v1043 = vmul.f32 %v578, %v996
    %v1044 = vmul.f32 %v583, %v996
    %v1045 = vmul.f32 %v588, %v996
    %v1046 = vmul.f32 %v593, %v996
    %v1047 = vmul.f32 %v598, %v996
    %v1048 = vmul.f32 %v603, %v996
    %v1049 = vmul.f32 %v608, %v996
    %v1050 = vmul.f32 %v613, %v996
    %v1051 = vmul.f32 %v618, %v996
    %v1052 = vmul.f32 %v623, %v996
    %v1053 = vmul.f32 %v628, %v996
    %v1054 = vmul.f32 %v633, %v996
    %v1055 = vmul.f32 %v638, %v996
    %v1056 = vmul.f32 %v643, %v996
    %v1057 = vmul.f32 %v648, %v996
    %v1058 = vmul.f32 %v653, %v996
    %v1059 = vmul.f32 %v658, %v996
    %v1060 = vmul.f32 %v663, %v996
    %v1061 = vmul.f32 %v668, %v996
    %1062 = vadd.xlane.f32.xlu0 %v998
    %v1063 = vpop.xlane.xlu0 %1062
    %1064 = vadd.xlane.f32.xlu0 %v999
    %v1065 = vpop.xlane.xlu0 %1064
    %1066 = vadd.xlane.f32.xlu0 %v1000
    %v1067 = vpop.xlane.xlu0 %1066
    %1068 = vadd.xlane.f32.xlu0 %v1001
    %v1069 = vpop.xlane.xlu0 %1068
    %1070 = vadd.xlane.f32.xlu0 %v1002
    %v1071 = vpop.xlane.xlu0 %1070
    %1072 = vadd.xlane.f32.xlu0 %v1003
    %v1073 = vpop.xlane.xlu0 %1072
    %1074 = vadd.xlane.f32.xlu0 %v1004
    %v1075 = vpop.xlane.xlu0 %1074
    %1076 = vadd.xlane.f32.xlu0 %v1005
    %v1077 = vpop.xlane.xlu0 %1076
    %1078 = vadd.xlane.f32.xlu0 %v1006
    %v1079 = vpop.xlane.xlu0 %1078
    %1080 = vadd.xlane.f32.xlu0 %v1007
    %v1081 = vpop.xlane.xlu0 %1080
    %1082 = vadd.xlane.f32.xlu0 %v1008
    %v1083 = vpop.xlane.xlu0 %1082
    %1084 = vadd.xlane.f32.xlu0 %v1009
    %v1085 = vpop.xlane.xlu0 %1084
    %1086 = vadd.xlane.f32.xlu0 %v1010
    %v1087 = vpop.xlane.xlu0 %1086
    %1088 = vadd.xlane.f32.xlu0 %v1011
    %v1089 = vpop.xlane.xlu0 %1088
    %1090 = vadd.xlane.f32.xlu0 %v1012
    %v1091 = vpop.xlane.xlu0 %1090
    %1092 = vadd.xlane.f32.xlu0 %v1013
    %v1093 = vpop.xlane.xlu0 %1092
    %1094 = vadd.xlane.f32.xlu0 %v1014
    %v1095 = vpop.xlane.xlu0 %1094
    %1096 = vadd.xlane.f32.xlu0 %v1015
    %v1097 = vpop.xlane.xlu0 %1096
    %1098 = vadd.xlane.f32.xlu0 %v1016
    %v1099 = vpop.xlane.xlu0 %1098
    %1100 = vadd.xlane.f32.xlu0 %v1017
    %v1101 = vpop.xlane.xlu0 %1100
    %1102 = vadd.xlane.f32.xlu0 %v1018
    %v1103 = vpop.xlane.xlu0 %1102
    %1104 = vadd.xlane.f32.xlu0 %v1019
    %v1105 = vpop.xlane.xlu0 %1104
    %1106 = vadd.xlane.f32.xlu0 %v1020
    %v1107 = vpop.xlane.xlu0 %1106
    %1108 = vadd.xlane.f32.xlu0 %v1021
    %v1109 = vpop.xlane.xlu0 %1108
    %1110 = vadd.xlane.f32.xlu0 %v1022
    %v1111 = vpop.xlane.xlu0 %1110
    %1112 = vadd.xlane.f32.xlu0 %v1023
    %v1113 = vpop.xlane.xlu0 %1112
    %1114 = vadd.xlane.f32.xlu0 %v1024
    %v1115 = vpop.xlane.xlu0 %1114
    %1116 = vadd.xlane.f32.xlu0 %v1025
    %v1117 = vpop.xlane.xlu0 %1116
    %1118 = vadd.xlane.f32.xlu0 %v1026
    %v1119 = vpop.xlane.xlu0 %1118
    %1120 = vadd.xlane.f32.xlu0 %v1027
    %v1121 = vpop.xlane.xlu0 %1120
    %1122 = vadd.xlane.f32.xlu0 %v1028
    %v1123 = vpop.xlane.xlu0 %1122
    %1124 = vadd.xlane.f32.xlu0 %v1029
    %v1125 = vpop.xlane.xlu0 %1124
    %1126 = vadd.xlane.f32.xlu0 %v1030
    %v1127 = vpop.xlane.xlu0 %1126
    %1128 = vadd.xlane.f32.xlu0 %v1031
    %v1129 = vpop.xlane.xlu0 %1128
    %1130 = vadd.xlane.f32.xlu0 %v1032
    %v1131 = vpop.xlane.xlu0 %1130
    %1132 = vadd.xlane.f32.xlu0 %v1033
    %v1133 = vpop.xlane.xlu0 %1132
    %1134 = vadd.xlane.f32.xlu0 %v1034
    %v1135 = vpop.xlane.xlu0 %1134
    %1136 = vadd.xlane.f32.xlu0 %v1035
    %v1137 = vpop.xlane.xlu0 %1136
    %1138 = vadd.xlane.f32.xlu0 %v1036
    %v1139 = vpop.xlane.xlu0 %1138
    %1140 = vadd.xlane.f32.xlu0 %v1037
    %v1141 = vpop.xlane.xlu0 %1140
    %1142 = vadd.xlane.f32.xlu0 %v1038
    %v1143 = vpop.xlane.xlu0 %1142
    %1144 = vadd.xlane.f32.xlu0 %v1039
    %v1145 = vpop.xlane.xlu0 %1144
    %1146 = vadd.xlane.f32.xlu0 %v1040
    %v1147 = vpop.xlane.xlu0 %1146
    %1148 = vadd.xlane.f32.xlu0 %v1041
    %v1149 = vpop.xlane.xlu0 %1148
    %1150 = vadd.xlane.f32.xlu0 %v1042
    %v1151 = vpop.xlane.xlu0 %1150
    %1152 = vadd.xlane.f32.xlu0 %v1043
    %v1153 = vpop.xlane.xlu0 %1152
    %1154 = vadd.xlane.f32.xlu0 %v1044
    %v1155 = vpop.xlane.xlu0 %1154
    %1156 = vadd.xlane.f32.xlu0 %v1045
    %v1157 = vpop.xlane.xlu0 %1156
    %1158 = vadd.xlane.f32.xlu0 %v1046
    %v1159 = vpop.xlane.xlu0 %1158
    %1160 = vadd.xlane.f32.xlu0 %v1047
    %v1161 = vpop.xlane.xlu0 %1160
    %1162 = vadd.xlane.f32.xlu0 %v1048
    %v1163 = vpop.xlane.xlu0 %1162
    %1164 = vadd.xlane.f32.xlu0 %v1049
    %v1165 = vpop.xlane.xlu0 %1164
    %1166 = vadd.xlane.f32.xlu0 %v1050
    %v1167 = vpop.xlane.xlu0 %1166
    %1168 = vadd.xlane.f32.xlu0 %v1051
    %v1169 = vpop.xlane.xlu0 %1168
    %1170 = vadd.xlane.f32.xlu0 %v1052
    %v1171 = vpop.xlane.xlu0 %1170
    %1172 = vadd.xlane.f32.xlu0 %v1053
    %v1173 = vpop.xlane.xlu0 %1172
    %1174 = vadd.xlane.f32.xlu0 %v1054
    %v1175 = vpop.xlane.xlu0 %1174
    %1176 = vadd.xlane.f32.xlu0 %v1055
    %v1177 = vpop.xlane.xlu0 %1176
    %1178 = vadd.xlane.f32.xlu0 %v1056
    %v1179 = vpop.xlane.xlu0 %1178
    %1180 = vadd.xlane.f32.xlu0 %v1057
    %v1181 = vpop.xlane.xlu0 %1180
    %1182 = vadd.xlane.f32.xlu0 %v1058
    %v1183 = vpop.xlane.xlu0 %1182
    %1184 = vadd.xlane.f32.xlu0 %v1059
    %v1185 = vpop.xlane.xlu0 %1184
    %1186 = vadd.xlane.f32.xlu0 %v1060
    %v1187 = vpop.xlane.xlu0 %1186
    %1188 = vadd.xlane.f32.xlu0 %v1061
    %v1189 = vpop.xlane.xlu0 %1188
    %vm1190 = vcmask 7168
    %1191 = vst.msk [vmem:[%s5] sm:$0xff] %vm1190, %v1063
    %1192 = vst.msk [vmem:[%s5 + $0x8] sm:$0xff] %vm1190, %v1065
    %1193 = vst.msk [vmem:[%s5 + $0x10] sm:$0xff] %vm1190, %v1067
    %1194 = vst.msk [vmem:[%s5 + $0x18] sm:$0xff] %vm1190, %v1069
    %1195 = vst.msk [vmem:[%s5 + $0x20] sm:$0xff] %vm1190, %v1071
    %1196 = vst.msk [vmem:[%s5 + $0x28] sm:$0xff] %vm1190, %v1073
    %1197 = vst.msk [vmem:[%s5 + $0x30] sm:$0xff] %vm1190, %v1075
    %1198 = vst.msk [vmem:[%s5 + $0x38] sm:$0xff] %vm1190, %v1077
    %1199 = vst.msk [vmem:[%s5 + $0x40] sm:$0xff] %vm1190, %v1079
    %1200 = vst.msk [vmem:[%s5 + $0x48] sm:$0xff] %vm1190, %v1081
    %1201 = vst.msk [vmem:[%s5 + $0x50] sm:$0xff] %vm1190, %v1083
    %1202 = vst.msk [vmem:[%s5 + $0x58] sm:$0xff] %vm1190, %v1085
    %1203 = vst.msk [vmem:[%s5 + $0x60] sm:$0xff] %vm1190, %v1087
    %1204 = vst.msk [vmem:[%s5 + $0x68] sm:$0xff] %vm1190, %v1089
    %1205 = vst.msk [vmem:[%s5 + $0x70] sm:$0xff] %vm1190, %v1091
    %1206 = vst.msk [vmem:[%s5 + $0x78] sm:$0xff] %vm1190, %v1093
    %1207 = vst.msk [vmem:[%s5 + $0x80] sm:$0xff] %vm1190, %v1095
    %1208 = vst.msk [vmem:[%s5 + $0x88] sm:$0xff] %vm1190, %v1097
    %1209 = vst.msk [vmem:[%s5 + $0x90] sm:$0xff] %vm1190, %v1099
    %1210 = vst.msk [vmem:[%s5 + $0x98] sm:$0xff] %vm1190, %v1101
    %1211 = vst.msk [vmem:[%s5 + $0xa0] sm:$0xff] %vm1190, %v1103
    %1212 = vst.msk [vmem:[%s5 + $0xa8] sm:$0xff] %vm1190, %v1105
    %1213 = vst.msk [vmem:[%s5 + $0xb0] sm:$0xff] %vm1190, %v1107
    %1214 = vst.msk [vmem:[%s5 + $0xb8] sm:$0xff] %vm1190, %v1109
    %1215 = vst.msk [vmem:[%s5 + $0xc0] sm:$0xff] %vm1190, %v1111
    %1216 = vst.msk [vmem:[%s5 + $0xc8] sm:$0xff] %vm1190, %v1113
    %1217 = vst.msk [vmem:[%s5 + $0xd0] sm:$0xff] %vm1190, %v1115
    %1218 = vst.msk [vmem:[%s5 + $0xd8] sm:$0xff] %vm1190, %v1117
    %1219 = vst.msk [vmem:[%s5 + $0xe0] sm:$0xff] %vm1190, %v1119
    %1220 = vst.msk [vmem:[%s5 + $0xe8] sm:$0xff] %vm1190, %v1121
    %1221 = vst.msk [vmem:[%s5 + $0xf0] sm:$0xff] %vm1190, %v1123
    %1222 = vst.msk [vmem:[%s5 + $0xf8] sm:$0xff] %vm1190, %v1125
    %1223 = vst.msk [vmem:[%s5 + $0x100] sm:$0xff] %vm1190, %v1127
    %1224 = vst.msk [vmem:[%s5 + $0x108] sm:$0xff] %vm1190, %v1129
    %1225 = vst.msk [vmem:[%s5 + $0x110] sm:$0xff] %vm1190, %v1131
    %1226 = vst.msk [vmem:[%s5 + $0x118] sm:$0xff] %vm1190, %v1133
    %1227 = vst.msk [vmem:[%s5 + $0x120] sm:$0xff] %vm1190, %v1135
    %1228 = vst.msk [vmem:[%s5 + $0x128] sm:$0xff] %vm1190, %v1137
    %1229 = vst.msk [vmem:[%s5 + $0x130] sm:$0xff] %vm1190, %v1139
    %1230 = vst.msk [vmem:[%s5 + $0x138] sm:$0xff] %vm1190, %v1141
    %1231 = vst.msk [vmem:[%s5 + $0x140] sm:$0xff] %vm1190, %v1143
    %1232 = vst.msk [vmem:[%s5 + $0x148] sm:$0xff] %vm1190, %v1145
    %1233 = vst.msk [vmem:[%s5 + $0x150] sm:$0xff] %vm1190, %v1147
    %1234 = vst.msk [vmem:[%s5 + $0x158] sm:$0xff] %vm1190, %v1149
    %1235 = vst.msk [vmem:[%s5 + $0x160] sm:$0xff] %vm1190, %v1151
    %1236 = vst.msk [vmem:[%s5 + $0x168] sm:$0xff] %vm1190, %v1153
    %1237 = vst.msk [vmem:[%s5 + $0x170] sm:$0xff] %vm1190, %v1155
    %1238 = vst.msk [vmem:[%s5 + $0x178] sm:$0xff] %vm1190, %v1157
    %1239 = vst.msk [vmem:[%s5 + $0x180] sm:$0xff] %vm1190, %v1159
    %1240 = vst.msk [vmem:[%s5 + $0x188] sm:$0xff] %vm1190, %v1161
    %1241 = vst.msk [vmem:[%s5 + $0x190] sm:$0xff] %vm1190, %v1163
    %1242 = vst.msk [vmem:[%s5 + $0x198] sm:$0xff] %vm1190, %v1165
    %1243 = vst.msk [vmem:[%s5 + $0x1a0] sm:$0xff] %vm1190, %v1167
    %1244 = vst.msk [vmem:[%s5 + $0x1a8] sm:$0xff] %vm1190, %v1169
    %1245 = vst.msk [vmem:[%s5 + $0x1b0] sm:$0xff] %vm1190, %v1171
    %1246 = vst.msk [vmem:[%s5 + $0x1b8] sm:$0xff] %vm1190, %v1173
    %1247 = vst.msk [vmem:[%s5 + $0x1c0] sm:$0xff] %vm1190, %v1175
    %1248 = vst.msk [vmem:[%s5 + $0x1c8] sm:$0xff] %vm1190, %v1177
    %1249 = vst.msk [vmem:[%s5 + $0x1d0] sm:$0xff] %vm1190, %v1179
    %1250 = vst.msk [vmem:[%s5 + $0x1d8] sm:$0xff] %vm1190, %v1181
    %1251 = vst.msk [vmem:[%s5 + $0x1e0] sm:$0xff] %vm1190, %v1183
    %1252 = vst.msk [vmem:[%s5 + $0x1e8] sm:$0xff] %vm1190, %v1185
    %1253 = vst.msk [vmem:[%s5 + $0x1f0] sm:$0xff] %vm1190, %v1187
    %1254 = vst.msk [vmem:[%s5 + $0x1f8] sm:$0xff] %vm1190, %v1189
    %v1255 = vld [vmem:[%s3] sm:$0x1]
    %v1257 = vlaneseq
    %v1258 = vshrl.u32 %v1257, 7
    %v1259 = vsub.s32 0, %v1258
    %v1260 = vrot.slane %v1255, %v1259
    %v1262 = vmul.f32 %v353, %v1260
    %v1263 = vmul.f32 %v358, %v1260
    %v1264 = vmul.f32 %v363, %v1260
    %v1265 = vmul.f32 %v368, %v1260
    %v1266 = vmul.f32 %v373, %v1260
    %v1267 = vmul.f32 %v378, %v1260
    %v1268 = vmul.f32 %v383, %v1260
    %v1269 = vmul.f32 %v388, %v1260
    %v1270 = vmul.f32 %v393, %v1260
    %v1271 = vmul.f32 %v398, %v1260
    %v1272 = vmul.f32 %v403, %v1260
    %v1273 = vmul.f32 %v408, %v1260
    %v1274 = vmul.f32 %v413, %v1260
    %v1275 = vmul.f32 %v418, %v1260
    %v1276 = vmul.f32 %v423, %v1260
    %v1277 = vmul.f32 %v428, %v1260
    %v1278 = vmul.f32 %v433, %v1260
    %v1279 = vmul.f32 %v438, %v1260
    %v1280 = vmul.f32 %v443, %v1260
    %v1281 = vmul.f32 %v448, %v1260
    %v1282 = vmul.f32 %v453, %v1260
    %v1283 = vmul.f32 %v458, %v1260
    %v1284 = vmul.f32 %v463, %v1260
    %v1285 = vmul.f32 %v468, %v1260
    %v1286 = vmul.f32 %v473, %v1260
    %v1287 = vmul.f32 %v478, %v1260
    %v1288 = vmul.f32 %v483, %v1260
    %v1289 = vmul.f32 %v488, %v1260
    %v1290 = vmul.f32 %v493, %v1260
    %v1291 = vmul.f32 %v498, %v1260
    %v1292 = vmul.f32 %v503, %v1260
    %v1293 = vmul.f32 %v508, %v1260
    %v1294 = vmul.f32 %v513, %v1260
    %v1295 = vmul.f32 %v518, %v1260
    %v1296 = vmul.f32 %v523, %v1260
    %v1297 = vmul.f32 %v528, %v1260
    %v1298 = vmul.f32 %v533, %v1260
    %v1299 = vmul.f32 %v538, %v1260
    %v1300 = vmul.f32 %v543, %v1260
    %v1301 = vmul.f32 %v548, %v1260
    %v1302 = vmul.f32 %v553, %v1260
    %v1303 = vmul.f32 %v558, %v1260
    %v1304 = vmul.f32 %v563, %v1260
    %v1305 = vmul.f32 %v568, %v1260
    %v1306 = vmul.f32 %v573, %v1260
    %v1307 = vmul.f32 %v578, %v1260
    %v1308 = vmul.f32 %v583, %v1260
    %v1309 = vmul.f32 %v588, %v1260
    %v1310 = vmul.f32 %v593, %v1260
    %v1311 = vmul.f32 %v598, %v1260
    %v1312 = vmul.f32 %v603, %v1260
    %v1313 = vmul.f32 %v608, %v1260
    %v1314 = vmul.f32 %v613, %v1260
    %v1315 = vmul.f32 %v618, %v1260
    %v1316 = vmul.f32 %v623, %v1260
    %v1317 = vmul.f32 %v628, %v1260
    %v1318 = vmul.f32 %v633, %v1260
    %v1319 = vmul.f32 %v638, %v1260
    %v1320 = vmul.f32 %v643, %v1260
    %v1321 = vmul.f32 %v648, %v1260
    %v1322 = vmul.f32 %v653, %v1260
    %v1323 = vmul.f32 %v658, %v1260
    %v1324 = vmul.f32 %v663, %v1260
    %v1325 = vmul.f32 %v668, %v1260
    %1326 = vadd.xlane.f32.xlu0 %v1262
    %v1327 = vpop.xlane.xlu0 %1326
    %1328 = vadd.xlane.f32.xlu0 %v1263
    %v1329 = vpop.xlane.xlu0 %1328
    %1330 = vadd.xlane.f32.xlu0 %v1264
    %v1331 = vpop.xlane.xlu0 %1330
    %1332 = vadd.xlane.f32.xlu0 %v1265
    %v1333 = vpop.xlane.xlu0 %1332
    %1334 = vadd.xlane.f32.xlu0 %v1266
    %v1335 = vpop.xlane.xlu0 %1334
    %1336 = vadd.xlane.f32.xlu0 %v1267
    %v1337 = vpop.xlane.xlu0 %1336
    %1338 = vadd.xlane.f32.xlu0 %v1268
    %v1339 = vpop.xlane.xlu0 %1338
    %1340 = vadd.xlane.f32.xlu0 %v1269
    %v1341 = vpop.xlane.xlu0 %1340
    %1342 = vadd.xlane.f32.xlu0 %v1270
    %v1343 = vpop.xlane.xlu0 %1342
    %1344 = vadd.xlane.f32.xlu0 %v1271
    %v1345 = vpop.xlane.xlu0 %1344
    %1346 = vadd.xlane.f32.xlu0 %v1272
    %v1347 = vpop.xlane.xlu0 %1346
    %1348 = vadd.xlane.f32.xlu0 %v1273
    %v1349 = vpop.xlane.xlu0 %1348
    %1350 = vadd.xlane.f32.xlu0 %v1274
    %v1351 = vpop.xlane.xlu0 %1350
    %1352 = vadd.xlane.f32.xlu0 %v1275
    %v1353 = vpop.xlane.xlu0 %1352
    %1354 = vadd.xlane.f32.xlu0 %v1276
    %v1355 = vpop.xlane.xlu0 %1354
    %1356 = vadd.xlane.f32.xlu0 %v1277
    %v1357 = vpop.xlane.xlu0 %1356
    %1358 = vadd.xlane.f32.xlu0 %v1278
    %v1359 = vpop.xlane.xlu0 %1358
    %1360 = vadd.xlane.f32.xlu0 %v1279
    %v1361 = vpop.xlane.xlu0 %1360
    %1362 = vadd.xlane.f32.xlu0 %v1280
    %v1363 = vpop.xlane.xlu0 %1362
    %1364 = vadd.xlane.f32.xlu0 %v1281
    %v1365 = vpop.xlane.xlu0 %1364
    %1366 = vadd.xlane.f32.xlu0 %v1282
    %v1367 = vpop.xlane.xlu0 %1366
    %1368 = vadd.xlane.f32.xlu0 %v1283
    %v1369 = vpop.xlane.xlu0 %1368
    %1370 = vadd.xlane.f32.xlu0 %v1284
    %v1371 = vpop.xlane.xlu0 %1370
    %1372 = vadd.xlane.f32.xlu0 %v1285
    %v1373 = vpop.xlane.xlu0 %1372
    %1374 = vadd.xlane.f32.xlu0 %v1286
    %v1375 = vpop.xlane.xlu0 %1374
    %1376 = vadd.xlane.f32.xlu0 %v1287
    %v1377 = vpop.xlane.xlu0 %1376
    %1378 = vadd.xlane.f32.xlu0 %v1288
    %v1379 = vpop.xlane.xlu0 %1378
    %1380 = vadd.xlane.f32.xlu0 %v1289
    %v1381 = vpop.xlane.xlu0 %1380
    %1382 = vadd.xlane.f32.xlu0 %v1290
    %v1383 = vpop.xlane.xlu0 %1382
    %1384 = vadd.xlane.f32.xlu0 %v1291
    %v1385 = vpop.xlane.xlu0 %1384
    %1386 = vadd.xlane.f32.xlu0 %v1292
    %v1387 = vpop.xlane.xlu0 %1386
    %1388 = vadd.xlane.f32.xlu0 %v1293
    %v1389 = vpop.xlane.xlu0 %1388
    %1390 = vadd.xlane.f32.xlu0 %v1294
    %v1391 = vpop.xlane.xlu0 %1390
    %1392 = vadd.xlane.f32.xlu0 %v1295
    %v1393 = vpop.xlane.xlu0 %1392
    %1394 = vadd.xlane.f32.xlu0 %v1296
    %v1395 = vpop.xlane.xlu0 %1394
    %1396 = vadd.xlane.f32.xlu0 %v1297
    %v1397 = vpop.xlane.xlu0 %1396
    %1398 = vadd.xlane.f32.xlu0 %v1298
    %v1399 = vpop.xlane.xlu0 %1398
    %1400 = vadd.xlane.f32.xlu0 %v1299
    %v1401 = vpop.xlane.xlu0 %1400
    %1402 = vadd.xlane.f32.xlu0 %v1300
    %v1403 = vpop.xlane.xlu0 %1402
    %1404 = vadd.xlane.f32.xlu0 %v1301
    %v1405 = vpop.xlane.xlu0 %1404
    %1406 = vadd.xlane.f32.xlu0 %v1302
    %v1407 = vpop.xlane.xlu0 %1406
    %1408 = vadd.xlane.f32.xlu0 %v1303
    %v1409 = vpop.xlane.xlu0 %1408
    %1410 = vadd.xlane.f32.xlu0 %v1304
    %v1411 = vpop.xlane.xlu0 %1410
    %1412 = vadd.xlane.f32.xlu0 %v1305
    %v1413 = vpop.xlane.xlu0 %1412
    %1414 = vadd.xlane.f32.xlu0 %v1306
    %v1415 = vpop.xlane.xlu0 %1414
    %1416 = vadd.xlane.f32.xlu0 %v1307
    %v1417 = vpop.xlane.xlu0 %1416
    %1418 = vadd.xlane.f32.xlu0 %v1308
    %v1419 = vpop.xlane.xlu0 %1418
    %1420 = vadd.xlane.f32.xlu0 %v1309
    %v1421 = vpop.xlane.xlu0 %1420
    %1422 = vadd.xlane.f32.xlu0 %v1310
    %v1423 = vpop.xlane.xlu0 %1422
    %1424 = vadd.xlane.f32.xlu0 %v1311
    %v1425 = vpop.xlane.xlu0 %1424
    %1426 = vadd.xlane.f32.xlu0 %v1312
    %v1427 = vpop.xlane.xlu0 %1426
    %1428 = vadd.xlane.f32.xlu0 %v1313
    %v1429 = vpop.xlane.xlu0 %1428
    %1430 = vadd.xlane.f32.xlu0 %v1314
    %v1431 = vpop.xlane.xlu0 %1430
    %1432 = vadd.xlane.f32.xlu0 %v1315
    %v1433 = vpop.xlane.xlu0 %1432
    %1434 = vadd.xlane.f32.xlu0 %v1316
    %v1435 = vpop.xlane.xlu0 %1434
    %1436 = vadd.xlane.f32.xlu0 %v1317
    %v1437 = vpop.xlane.xlu0 %1436
    %1438 = vadd.xlane.f32.xlu0 %v1318
    %v1439 = vpop.xlane.xlu0 %1438
    %1440 = vadd.xlane.f32.xlu0 %v1319
    %v1441 = vpop.xlane.xlu0 %1440
    %1442 = vadd.xlane.f32.xlu0 %v1320
    %v1443 = vpop.xlane.xlu0 %1442
    %1444 = vadd.xlane.f32.xlu0 %v1321
    %v1445 = vpop.xlane.xlu0 %1444
    %1446 = vadd.xlane.f32.xlu0 %v1322
    %v1447 = vpop.xlane.xlu0 %1446
    %1448 = vadd.xlane.f32.xlu0 %v1323
    %v1449 = vpop.xlane.xlu0 %1448
    %1450 = vadd.xlane.f32.xlu0 %v1324
    %v1451 = vpop.xlane.xlu0 %1450
    %1452 = vadd.xlane.f32.xlu0 %v1325
    %v1453 = vpop.xlane.xlu0 %1452
    %1454 = vst.msk [vmem:[%s6] sm:$0xff] %vm1190, %v1327
    %1455 = vst.msk [vmem:[%s6 + $0x8] sm:$0xff] %vm1190, %v1329
    %1456 = vst.msk [vmem:[%s6 + $0x10] sm:$0xff] %vm1190, %v1331
    %1457 = vst.msk [vmem:[%s6 + $0x18] sm:$0xff] %vm1190, %v1333
    %1458 = vst.msk [vmem:[%s6 + $0x20] sm:$0xff] %vm1190, %v1335
    %1459 = vst.msk [vmem:[%s6 + $0x28] sm:$0xff] %vm1190, %v1337
    %1460 = vst.msk [vmem:[%s6 + $0x30] sm:$0xff] %vm1190, %v1339
    %1461 = vst.msk [vmem:[%s6 + $0x38] sm:$0xff] %vm1190, %v1341
    %1462 = vst.msk [vmem:[%s6 + $0x40] sm:$0xff] %vm1190, %v1343
    %1463 = vst.msk [vmem:[%s6 + $0x48] sm:$0xff] %vm1190, %v1345
    %1464 = vst.msk [vmem:[%s6 + $0x50] sm:$0xff] %vm1190, %v1347
    %1465 = vst.msk [vmem:[%s6 + $0x58] sm:$0xff] %vm1190, %v1349
    %1466 = vst.msk [vmem:[%s6 + $0x60] sm:$0xff] %vm1190, %v1351
    %1467 = vst.msk [vmem:[%s6 + $0x68] sm:$0xff] %vm1190, %v1353
    %1468 = vst.msk [vmem:[%s6 + $0x70] sm:$0xff] %vm1190, %v1355
    %1469 = vst.msk [vmem:[%s6 + $0x78] sm:$0xff] %vm1190, %v1357
    %1470 = vst.msk [vmem:[%s6 + $0x80] sm:$0xff] %vm1190, %v1359
    %1471 = vst.msk [vmem:[%s6 + $0x88] sm:$0xff] %vm1190, %v1361
    %1472 = vst.msk [vmem:[%s6 + $0x90] sm:$0xff] %vm1190, %v1363
    %1473 = vst.msk [vmem:[%s6 + $0x98] sm:$0xff] %vm1190, %v1365
    %1474 = vst.msk [vmem:[%s6 + $0xa0] sm:$0xff] %vm1190, %v1367
    %1475 = vst.msk [vmem:[%s6 + $0xa8] sm:$0xff] %vm1190, %v1369
    %1476 = vst.msk [vmem:[%s6 + $0xb0] sm:$0xff] %vm1190, %v1371
    %1477 = vst.msk [vmem:[%s6 + $0xb8] sm:$0xff] %vm1190, %v1373
    %1478 = vst.msk [vmem:[%s6 + $0xc0] sm:$0xff] %vm1190, %v1375
    %1479 = vst.msk [vmem:[%s6 + $0xc8] sm:$0xff] %vm1190, %v1377
    %1480 = vst.msk [vmem:[%s6 + $0xd0] sm:$0xff] %vm1190, %v1379
    %1481 = vst.msk [vmem:[%s6 + $0xd8] sm:$0xff] %vm1190, %v1381
    %1482 = vst.msk [vmem:[%s6 + $0xe0] sm:$0xff] %vm1190, %v1383
    %1483 = vst.msk [vmem:[%s6 + $0xe8] sm:$0xff] %vm1190, %v1385
    %1484 = vst.msk [vmem:[%s6 + $0xf0] sm:$0xff] %vm1190, %v1387
    %1485 = vst.msk [vmem:[%s6 + $0xf8] sm:$0xff] %vm1190, %v1389
    %1486 = vst.msk [vmem:[%s6 + $0x100] sm:$0xff] %vm1190, %v1391
    %1487 = vst.msk [vmem:[%s6 + $0x108] sm:$0xff] %vm1190, %v1393
    %1488 = vst.msk [vmem:[%s6 + $0x110] sm:$0xff] %vm1190, %v1395
    %1489 = vst.msk [vmem:[%s6 + $0x118] sm:$0xff] %vm1190, %v1397
    %1490 = vst.msk [vmem:[%s6 + $0x120] sm:$0xff] %vm1190, %v1399
    %1491 = vst.msk [vmem:[%s6 + $0x128] sm:$0xff] %vm1190, %v1401
    %1492 = vst.msk [vmem:[%s6 + $0x130] sm:$0xff] %vm1190, %v1403
    %1493 = vst.msk [vmem:[%s6 + $0x138] sm:$0xff] %vm1190, %v1405
    %1494 = vst.msk [vmem:[%s6 + $0x140] sm:$0xff] %vm1190, %v1407
    %1495 = vst.msk [vmem:[%s6 + $0x148] sm:$0xff] %vm1190, %v1409
    %1496 = vst.msk [vmem:[%s6 + $0x150] sm:$0xff] %vm1190, %v1411
    %1497 = vst.msk [vmem:[%s6 + $0x158] sm:$0xff] %vm1190, %v1413
    %1498 = vst.msk [vmem:[%s6 + $0x160] sm:$0xff] %vm1190, %v1415
    %1499 = vst.msk [vmem:[%s6 + $0x168] sm:$0xff] %vm1190, %v1417
    %1500 = vst.msk [vmem:[%s6 + $0x170] sm:$0xff] %vm1190, %v1419
    %1501 = vst.msk [vmem:[%s6 + $0x178] sm:$0xff] %vm1190, %v1421
    %1502 = vst.msk [vmem:[%s6 + $0x180] sm:$0xff] %vm1190, %v1423
    %1503 = vst.msk [vmem:[%s6 + $0x188] sm:$0xff] %vm1190, %v1425
    %1504 = vst.msk [vmem:[%s6 + $0x190] sm:$0xff] %vm1190, %v1427
    %1505 = vst.msk [vmem:[%s6 + $0x198] sm:$0xff] %vm1190, %v1429
    %1506 = vst.msk [vmem:[%s6 + $0x1a0] sm:$0xff] %vm1190, %v1431
    %1507 = vst.msk [vmem:[%s6 + $0x1a8] sm:$0xff] %vm1190, %v1433
    %1508 = vst.msk [vmem:[%s6 + $0x1b0] sm:$0xff] %vm1190, %v1435
    %1509 = vst.msk [vmem:[%s6 + $0x1b8] sm:$0xff] %vm1190, %v1437
    %1510 = vst.msk [vmem:[%s6 + $0x1c0] sm:$0xff] %vm1190, %v1439
    %1511 = vst.msk [vmem:[%s6 + $0x1c8] sm:$0xff] %vm1190, %v1441
    %1512 = vst.msk [vmem:[%s6 + $0x1d0] sm:$0xff] %vm1190, %v1443
    %1513 = vst.msk [vmem:[%s6 + $0x1d8] sm:$0xff] %vm1190, %v1445
    %1514 = vst.msk [vmem:[%s6 + $0x1e0] sm:$0xff] %vm1190, %v1447
    %1515 = vst.msk [vmem:[%s6 + $0x1e8] sm:$0xff] %vm1190, %v1449
    %1516 = vst.msk [vmem:[%s6 + $0x1f0] sm:$0xff] %vm1190, %v1451
    %1517 = vst.msk [vmem:[%s6 + $0x1f8] sm:$0xff] %vm1190, %v1453
    // Predicated region
    $region18: #{tpu_custom_call.1} parent=1 // pred_check
      _
    $region19: #{tpu_custom_call.1} parent=1 // pred_check_branch
      %1519 = sbr.rel (0) target = $region21
    $region20: #{tpu_custom_call.1} parent=1 // pred_region
      %s1521 = ssub.s32 4096, 4096
      %1522 = vsyncadd [#allocation3], %s1521
      %s1523 = sshll.u32 [#allocation2], 4
      %s1524 = int_to_ptr.vmem [resolvable:$true] %s1523
      %1529 = dma.vmem_to_hbm [thread:$0]  %s1524, 4096, %s4, [#allocation3], 64, 64, 4
    $region21: #{tpu_custom_call.1} parent=1 // pred_fallthru
      _
    // Predicated region
    $region22: #{tpu_custom_call.1} parent=1 // pred_check
      _
    $region23: #{tpu_custom_call.1} parent=1 // pred_check_branch
      %1531 = sbr.rel (0) target = $region25
    $region24: #{tpu_custom_call.1} parent=1 // pred_region
      _
    $region25: #{tpu_custom_call.1} parent=1 // pred_fallthru
      _
    // Predicated region
    $region26: #{tpu_custom_call.1} parent=1 // pred_check
      _
    $region27: #{tpu_custom_call.1} parent=1 // pred_check_branch
      %1533 = sbr.rel (0) target = $region29
    $region28: #{tpu_custom_call.1} parent=1 // pred_region
      _
    $region29: #{tpu_custom_call.1} parent=1 // pred_fallthru
      _
    // Predicated region
    $region30: #{tpu_custom_call.1} parent=1 // pred_check
      _
    $region31: #{tpu_custom_call.1} parent=1 // pred_check_branch
      %1535 = sbr.rel (0) target = $region33
    $region32: #{tpu_custom_call.1} parent=1 // pred_region
      %1536 = dma.done [#allocation3], 4096
    $region33: #{tpu_custom_call.1} parent=1 // pred_fallthru
      _
    // Predicated region
    $region34: #{tpu_custom_call.1} parent=1 // pred_check
      _
    $region35: #{tpu_custom_call.1} parent=1 // pred_check_branch
      %1538 = sbr.rel (0) target = $region37
    $region36: #{tpu_custom_call.1} parent=1 // pred_region
      _
    $region37: #{tpu_custom_call.1} parent=1 // pred_fallthru
      _
    // Predicated region
    $region38: #{tpu_custom_call.1} parent=1 // pred_check
      _
    $region39: #{tpu_custom_call.1} parent=1 // pred_check_branch
      %1540 = sbr.rel (0) target = $region41
    $region40: #{tpu_custom_call.1} parent=1 // pred_region
      _
    $region41: #{tpu_custom_call.1} parent=1 // pred_fallthru
      _
    %1541 = vsyncpa [#allocation3], 1

</llo_original>
